<compile_context>
chip_gen: v7x
topology: tpu7x:2x2x1
jax: 0.10.0
libtpu: 0.0.40
codegen_flags: <defaults>
</compile_context>

<pallas_src>
import functools

import jax
import jax.numpy as jnp
from jax.experimental import pallas as pl
from jax.experimental.pallas import tpu as pltpu

K_EMPH = 9  # the constant `k` inside Loss.forward


def _round8(n):
    return ((n + 7) // 8) * 8


def _slab_layout(NX, NU, H, NK):
    """Row layout of the packed parameter slab (each param starts on an 8-row boundary)."""
    width = max(H, NK, NX)
    shapes = [("we1", NX, H), ("be1", 1, H), ("we2", H, NK), ("be2", 1, NK),
              ("wd1", NK, H), ("bd1", 1, H), ("wd2", H, NX), ("bd2", 1, NX),
              ("ka", NK, NK), ("kb", NU, NK)]
    lay, off = {}, 0
    for name, r, c in shapes:
        lay[name] = (off, r, c)
        off = _round8(off + r)
    return lay, off, width


def pack_params(params):
    """Pack the 10 parameter arrays into one zero-padded f32 slab (single kernel DMA)."""
    NX, H = params["we1"].shape
    NK = params["we2"].shape[1]
    NU = params["kb"].shape[0]
    lay, rows, width = _slab_layout(NX, NU, H, NK)
    slab = jnp.zeros((rows, width), jnp.float32)
    for name, (off, r, c) in lay.items():
        slab = slab.at[off:off + r, 0:c].set(
            jnp.asarray(params[name], jnp.float32).reshape(r, c))
    return {"slab": slab, "layout": lay, "dims": (NX, NU, H, NK)}


def _loss_kernel(dims, lay, hp_ref, x_ref, u_ref, p_ref, out_ref):
    B, P, NX, NU, H, NK, B_pad = dims
    k = jnp.float32(K_EMPH)
    pad_rows = B_pad - B

    # Hyperparameters from SMEM (changing them does not trigger recompilation).
    a1, a2, a3, a4 = hp_ref[0], hp_ref[1], hp_ref[2], hp_ref[3]
    a5, a6, a7 = hp_ref[4], hp_ref[5], hp_ref[6]

    # ---- unpack the parameter slab (one DMA; aligned static slices) ----
    slab = p_ref[...]

    def prm(name):
        off, r, c = lay[name]
        return slab[off:off + r, 0:c]

    we1, be1, we2, be2 = prm("we1"), prm("be1"), prm("we2"), prm("be2")
    wd1, bd1, wd2, bd2 = prm("wd1"), prm("bd1"), prm("wd2"), prm("bd2")
    ka, kb = prm("ka"), prm("kb")

    def en(v):
        h = jnp.maximum(jnp.dot(v, we1, preferred_element_type=jnp.float32) + be1, 0.0)
        return jnp.dot(h, we2, preferred_element_type=jnp.float32) + be2

    def de(z):
        h = jnp.maximum(jnp.dot(z, wd1, preferred_element_type=jnp.float32) + bd1, 0.0)
        return jnp.dot(h, wd2, preferred_element_type=jnp.float32) + bd2

    # ---- time-major, batch-padded state slab built in-kernel (no wrapper transpose) ----
    x2 = x_ref[...]                                   # [B, (P+1)*NX]  lane-packed per batch
    zrow = jnp.zeros((pad_rows, NX), jnp.float32) if pad_rows else None
    parts = []
    for t in range(P + 1):
        parts.append(x2[:, t * NX:(t + 1) * NX])      # [B, NX]   time step t
        if pad_rows:
            parts.append(zrow)                        # pad batch to a full sublane tile
    xF = jnp.concatenate(parts, axis=0)               # [(P+1)*B_pad, NX]  time-major

    u2 = u_ref[...]                                   # [B, P*NU]
    if pad_rows:
        uL = jnp.concatenate([u2, jnp.zeros((pad_rows, P * NU), jnp.float32)], axis=0)
    else:
        uL = u2                                       # [B_pad, P*NU]

    # ---- encoder / reconstruction decoder, batched over every time step at once ----
    en_all = en(xF)                                   # [(P+1)*B_pad, NK]
    z0 = en_all[:B_pad, :]                            # en(x[:, 0, :])
    ex_all = en_all[B_pad:, :]                        # en(x[:, 1.., :])
    xt_all = xF[B_pad:, :]                            # x[:, 1.., :]
    dt_all = de(ex_all)                               # de(en(x[:, 1.., :])) (t=0 skipped)

    # ---- Koopman roll-out collapsed into two wide matmuls (no serial per-step chain) ----
    # Powers A^1..A^P are independent of x/u -> they overlap the encoder on the MXU.
    apow = [ka]
    for _ in range(P - 1):
        apow.append(jnp.dot(apow[-1], ka, preferred_element_type=jnp.float32))
    ri = jax.lax.broadcasted_iota(jnp.int32, (NK, NK), 0)
    ci = jax.lax.broadcasted_iota(jnp.int32, (NK, NK), 1)
    eye = jnp.where(ri == ci, jnp.float32(1.0), jnp.float32(0.0))
    powz = [eye] + apow                               # A^0 .. A^P

    apack = jnp.concatenate(apow, axis=1)             # [NK, P*NK]   col-block i = A^(i+1)

    zkk = jnp.zeros((NK, NK), jnp.float32)
    tmat = jnp.concatenate(                           # [P*NK, P*NK] block (j,i) = A^(i-j)
        [jnp.concatenate([zkk] * j + [powz[i - j] for i in range(j, P)], axis=1)
         for j in range(P)], axis=0)

    zuk = jnp.zeros((NU, NK), jnp.float32)
    kbbd = jnp.concatenate(                           # [P*NU, P*NK]  block-diag(kb)
        [jnp.concatenate([zuk] * j + [kb] + [zuk] * (P - 1 - j), axis=1)
         for j in range(P)], axis=0)

    ubL = jnp.dot(uL, kbbd, preferred_element_type=jnp.float32)       # [B_pad, P*NK]
    zL = (jnp.dot(z0, apack, preferred_element_type=jnp.float32)
          + jnp.dot(ubL, tmat, preferred_element_type=jnp.float32))   # [B_pad, P*NK]
    # lane-packed -> time-major via aligned 8-row blocks
    z_all = jnp.concatenate([zL[:, i * NK:(i + 1) * NK] for i in range(P)], axis=0)

    pred_all = de(z_all)                              # [P*B_pad, NX]

    # ---- reductions ----
    col = jax.lax.broadcasted_iota(jnp.int32, (1, NX), 1)
    w = jnp.where(col < 2, k, jnp.float32(1.0))       # column emphasis [k, k, 1, ...]

    dxp = xt_all - pred_all
    dxd = xt_all - dt_all
    dz = ex_all - z_all
    if pad_rows:
        # Zero padded batch rows (decoder biases make their predictions nonzero).
        bmask = jnp.where(jax.lax.broadcasted_iota(jnp.int32, (B_pad, 1), 0) < B,
                          jnp.float32(1.0), jnp.float32(0.0))
        valid = jnp.concatenate([bmask] * P, axis=0)  # [P*B_pad, 1]
        dxp = dxp * valid
        dxd = dxd * valid
        dz = dz * valid

    Lxx = jnp.sum(dxp * dxp * w)
    Lox = jnp.sum(dxd * dxd * w)
    Lxo = jnp.sum(dz * dz)

    # torch.norm(..., p=inf) per step (max over batch and state), summed over steps.
    dxp3 = jnp.abs(dxp).reshape(P, B_pad, NX)
    dxd3 = jnp.abs(dxd).reshape(P, B_pad, NX)
    m1 = jnp.max(jnp.max(dxp3, axis=2, keepdims=True), axis=1, keepdims=True)
    m2 = jnp.max(jnp.max(dxd3, axis=2, keepdims=True), axis=1, keepdims=True)
    Loo = jnp.sum(m1) + jnp.sum(m2)

    ave = jnp.float32(B * P)
    Lxx = Lxx / ave
    Lxo = Lxo / ave
    Lox = Lox / ave
    Loo = Loo / ave
    Lco = jnp.float32(0.0)     # never incremented in the reference implementation

    # L2 regularization straight from the slab blocks (zero padding contributes nothing).
    en_end = lay["wd1"][0]
    k_start = lay["ka"][0]
    en_blk = slab[0:en_end, :]
    de_blk = slab[en_end:k_start, :]
    L2_en = jnp.sum(en_blk * en_blk)
    L2_de = jnp.sum(de_blk * de_blk)

    out_ref[0, 0] = (a1 * Lox + a2 * Lxx + a3 * k * Lxo + a4 * k * Loo
                     + a5 * L2_en + a6 * L2_de + a7 * Lco)


def koopman_loss_pallas(packed, x, u, hp, P):
    NX, NU, H, NK = packed["dims"]
    lay = packed["layout"]
    slab = packed["slab"]
    B = x.shape[0]
    B_pad = _round8(B)

    # Free (bitcast) reshapes only -- no transpose / pad HLOs on the host side.
    x2d = x.reshape(B, (P + 1) * NX)
    u2d = u.reshape(B, P * NU)
    hp_arr = jnp.asarray(tuple(hp) + (0.0,), jnp.float32)   # a1..a7 (+pad) in SMEM

    kernel = functools.partial(_loss_kernel, (B, P, NX, NU, H, NK, B_pad), lay)

    flops = 2 * ((P + 1) * B_pad * (NX * H + H * NK)         # encoder
                 + 2 * P * B_pad * (NK * H + H * NX)         # decoders
                 + (P - 1) * NK * NK * NK                    # powers of A
                 + B_pad * (P * NU * P * NK + NK * P * NK + P * NK * P * NK))
    bytes_accessed = 4 * (int(x2d.size) + int(u2d.size) + int(slab.size)
                          + int(hp_arr.size) + 1)

    vmem = pl.BlockSpec(memory_space=pltpu.MemorySpace.VMEM)
    smem = pl.BlockSpec(memory_space=pltpu.MemorySpace.SMEM)
    out = pl.pallas_call(
        kernel,
        out_shape=jax.ShapeDtypeStruct((1, 1), jnp.float32),
        in_specs=[smem, vmem, vmem, vmem],
        out_specs=pl.BlockSpec(memory_space=pltpu.MemorySpace.SMEM),
        cost_estimate=pl.CostEstimate(flops=int(flops), transcendentals=0,
                                      bytes_accessed=int(bytes_accessed)),
    )(hp_arr, x2d, u2d, slab)
    return out[0, 0]


def koopman_loss_ref(params, x, u, hp, P):
    """Pure-JAX reference mirroring the PyTorch Loss.forward semantics."""
    a1, a2, a3, a4, a5, a6, a7 = hp
    k = 9.0

    def en(v):
        h = jnp.maximum(v @ params["we1"] + params["be1"], 0.0)
        return h @ params["we2"] + params["be2"]

    def de(z):
        h = jnp.maximum(z @ params["wd1"] + params["bd1"], 0.0)
        return h @ params["wd2"] + params["bd2"]

    B = x.shape[0]
    en_x = en(x)          # [B, P+1, NK]
    de_en_x = de(en_x)    # [B, P+1, 3]
    z = en(x[:, 0, :])
    Lxx = Lxo = Lox = Loo = 0.0
    for i in range(P):
        z = z @ params["ka"] + u[:, i, :] @ params["kb"]
        pred = de(z)
        xt = x[:, i + 1, :]
        Lxx += jnp.sum((xt[:, :2] - pred[:, :2]) ** 2) * k + jnp.sum((xt[:, 2] - pred[:, 2]) ** 2)
        Lxo += jnp.sum((en_x[:, i + 1, :] - z) ** 2)
        Lox += (jnp.sum((xt[:, :2] - de_en_x[:, i + 1, :2]) ** 2) * k
                + jnp.sum((xt[:, 2] - de_en_x[:, i + 1, 2]) ** 2))
        Loo += (jnp.max(jnp.abs(xt - pred)) + jnp.max(jnp.abs(xt - de_en_x[:, i + 1, :])))
    ave = B * P
    Lxx, Lxo, Lox, Loo, Lco = Lxx / ave, Lxo / ave, Lox / ave, Loo / ave, 0.0
    L2_en = sum(jnp.sum(params[n] ** 2) for n in ("we1", "be1", "we2", "be2"))
    L2_de = sum(jnp.sum(params[n] ** 2) for n in ("wd1", "bd1", "wd2", "bd2"))
    return a1 * Lox + a2 * Lxx + a3 * k * Lxo + a4 * k * Loo + a5 * L2_en + a6 * L2_de + a7 * Lco


if __name__ == "__main__":
    # Small shapes implied by the forward: state dim NX=3 (slices [:, :2] and [:, 2]).
    B, P, NX, NU, H, NK = 4, 4, 3, 2, 32, 16
    hp = (1.0, 1.0, 0.3, 0.3, 1e-4, 1e-4, 0.1)   # a1..a7

    key = jax.random.PRNGKey(0)
    ks = jax.random.split(key, 12)
    params = {
        "we1": 0.3 * jax.random.normal(ks[0], (NX, H), jnp.float32),
        "be1": 0.1 * jax.random.normal(ks[1], (1, H), jnp.float32),
        "we2": 0.3 * jax.random.normal(ks[2], (H, NK), jnp.float32),
        "be2": 0.1 * jax.random.normal(ks[3], (1, NK), jnp.float32),
        "wd1": 0.3 * jax.random.normal(ks[4], (NK, H), jnp.float32),
        "bd1": 0.1 * jax.random.normal(ks[5], (1, H), jnp.float32),
        "wd2": 0.3 * jax.random.normal(ks[6], (H, NX), jnp.float32),
        "bd2": 0.1 * jax.random.normal(ks[7], (1, NX), jnp.float32),
        "ka": 0.2 * jax.random.normal(ks[8], (NK, NK), jnp.float32),
        "kb": 0.2 * jax.random.normal(ks[9], (NU, NK), jnp.float32),
    }
    x = jax.random.normal(ks[10], (B, P + 1, NX), jnp.float32)
    u = jax.random.normal(ks[11], (B, P, NU), jnp.float32)

    packed = pack_params(params)   # one-time parameter packing, outside the loss path

    loss_pallas = jax.block_until_ready(koopman_loss_pallas(packed, x, u, hp, P))
    loss_ref = jax.block_until_ready(koopman_loss_ref(params, x, u, hp, P))

    assert jnp.isfinite(loss_pallas), "non-finite loss"
    assert jnp.allclose(loss_pallas, loss_ref, rtol=5e-3, atol=5e-3), (loss_pallas, loss_ref)
    print("KERNEL_OK")
</pallas_src>

<mosaic_0001>
module attributes {stable_mosaic.version = 11 : i64} {
  func.func @_loss_kernel(%arg0: memref<8xf32, #tpu.memory_space<smem>>, %arg1: memref<4x15xf32, #tpu.memory_space<vmem>>, %arg2: memref<4x8xf32, #tpu.memory_space<vmem>>, %arg3: memref<144x32xf32, #tpu.memory_space<vmem>>, %arg4: memref<1x1xf32, #tpu.memory_space<smem>>) attributes {dimension_semantics = [], scalar_prefetch = 0 : i64, scratch_operands = 0 : i64, tpu.core_type = #tpu.core_type<tc>} {
    %c0 = arith.constant 0 : index
    %0 = memref.load %arg0[%c0] : memref<8xf32, #tpu.memory_space<smem>>
    %c1 = arith.constant 1 : index
    %1 = memref.load %arg0[%c1] : memref<8xf32, #tpu.memory_space<smem>>
    %c2 = arith.constant 2 : index
    %2 = memref.load %arg0[%c2] : memref<8xf32, #tpu.memory_space<smem>>
    %c3 = arith.constant 3 : index
    %3 = memref.load %arg0[%c3] : memref<8xf32, #tpu.memory_space<smem>>
    %c4 = arith.constant 4 : index
    %4 = memref.load %arg0[%c4] : memref<8xf32, #tpu.memory_space<smem>>
    %c5 = arith.constant 5 : index
    %5 = memref.load %arg0[%c5] : memref<8xf32, #tpu.memory_space<smem>>
    %c6 = arith.constant 6 : index
    %6 = memref.load %arg0[%c6] : memref<8xf32, #tpu.memory_space<smem>>
    %c0_0 = arith.constant 0 : index
    %c0_1 = arith.constant 0 : index
    %7 = vector.load %arg3[%c0_0, %c0_1] : memref<144x32xf32, #tpu.memory_space<vmem>>, vector<144x32xf32>
    %8 = vector.extract_strided_slice %7 {offsets = [0, 0], sizes = [3, 32], strides = [1, 1]} : vector<144x32xf32> to vector<3x32xf32>
    %9 = vector.extract_strided_slice %7 {offsets = [8, 0], sizes = [1, 32], strides = [1, 1]} : vector<144x32xf32> to vector<1x32xf32>
    %10 = vector.extract_strided_slice %7 {offsets = [16, 0], sizes = [32, 16], strides = [1, 1]} : vector<144x32xf32> to vector<32x16xf32>
    %11 = vector.extract_strided_slice %7 {offsets = [48, 0], sizes = [1, 16], strides = [1, 1]} : vector<144x32xf32> to vector<1x16xf32>
    %12 = vector.extract_strided_slice %7 {offsets = [56, 0], sizes = [16, 32], strides = [1, 1]} : vector<144x32xf32> to vector<16x32xf32>
    %13 = vector.extract_strided_slice %7 {offsets = [72, 0], sizes = [1, 32], strides = [1, 1]} : vector<144x32xf32> to vector<1x32xf32>
    %14 = vector.extract_strided_slice %7 {offsets = [80, 0], sizes = [32, 3], strides = [1, 1]} : vector<144x32xf32> to vector<32x3xf32>
    %15 = vector.extract_strided_slice %7 {offsets = [112, 0], sizes = [1, 3], strides = [1, 1]} : vector<144x32xf32> to vector<1x3xf32>
    %16 = vector.extract_strided_slice %7 {offsets = [120, 0], sizes = [16, 16], strides = [1, 1]} : vector<144x32xf32> to vector<16x16xf32>
    %17 = vector.extract_strided_slice %7 {offsets = [136, 0], sizes = [2, 16], strides = [1, 1]} : vector<144x32xf32> to vector<2x16xf32>
    %c0_2 = arith.constant 0 : index
    %c0_3 = arith.constant 0 : index
    %18 = vector.load %arg1[%c0_2, %c0_3] : memref<4x15xf32, #tpu.memory_space<vmem>>, vector<4x15xf32>
    %cst = arith.constant 0.000000e+00 : f32
    %19 = vector.broadcast %cst : f32 to vector<4x3xf32>
    %20 = vector.extract_strided_slice %18 {offsets = [0, 0], sizes = [4, 3], strides = [1, 1]} : vector<4x15xf32> to vector<4x3xf32>
    %21 = vector.extract_strided_slice %18 {offsets = [0, 3], sizes = [4, 3], strides = [1, 1]} : vector<4x15xf32> to vector<4x3xf32>
    %22 = vector.extract_strided_slice %18 {offsets = [0, 6], sizes = [4, 3], strides = [1, 1]} : vector<4x15xf32> to vector<4x3xf32>
    %23 = vector.extract_strided_slice %18 {offsets = [0, 9], sizes = [4, 3], strides = [1, 1]} : vector<4x15xf32> to vector<4x3xf32>
    %24 = vector.extract_strided_slice %18 {offsets = [0, 12], sizes = [4, 3], strides = [1, 1]} : vector<4x15xf32> to vector<4x3xf32>
    %25 = tpu.concatenate %20, %19, %21, %19, %22, %19, %23, %19, %24, %19 in 0 : vector<4x3xf32>, vector<4x3xf32>, vector<4x3xf32>, vector<4x3xf32>, vector<4x3xf32>, vector<4x3xf32>, vector<4x3xf32>, vector<4x3xf32>, vector<4x3xf32>, vector<4x3xf32> -> vector<40x3xf32>
    %c0_4 = arith.constant 0 : index
    %c0_5 = arith.constant 0 : index
    %26 = vector.load %arg2[%c0_4, %c0_5] : memref<4x8xf32, #tpu.memory_space<vmem>>, vector<4x8xf32>
    %cst_6 = arith.constant 0.000000e+00 : f32
    %27 = vector.broadcast %cst_6 : f32 to vector<4x8xf32>
    %28 = tpu.concatenate %26, %27 in 0 : vector<4x8xf32>, vector<4x8xf32> -> vector<8x8xf32>
    %cst_7 = arith.constant dense<0.000000e+00> : vector<40x32xf32>
    %29 = tpu.matmul %25, %8, %cst_7 {dimension_numbers = #tpu.dot_dimension_numbers<[1], [0], [0], [1], [0, 0, 1, 1], [], []>} : vector<40x3xf32>, vector<3x32xf32>, vector<40x32xf32> -> vector<40x32xf32>
    %30 = vector.broadcast %9 : vector<1x32xf32> to vector<40x32xf32>
    %31 = arith.addf %29, %30 : vector<40x32xf32>
    %cst_8 = arith.constant 0.000000e+00 : f32
    %32 = vector.broadcast %cst_8 : f32 to vector<40x32xf32>
    %33 = arith.maximumf %31, %32 : vector<40x32xf32>
    %cst_9 = arith.constant dense<0.000000e+00> : vector<40x16xf32>
    %34 = tpu.matmul %33, %10, %cst_9 {dimension_numbers = #tpu.dot_dimension_numbers<[1], [0], [0], [1], [0, 0, 1, 1], [], []>} : vector<40x32xf32>, vector<32x16xf32>, vector<40x16xf32> -> vector<40x16xf32>
    %35 = vector.broadcast %11 : vector<1x16xf32> to vector<40x16xf32>
    %36 = arith.addf %34, %35 : vector<40x16xf32>
    %37 = vector.extract_strided_slice %36 {offsets = [0, 0], sizes = [8, 16], strides = [1, 1]} : vector<40x16xf32> to vector<8x16xf32>
    %38 = vector.extract_strided_slice %36 {offsets = [8, 0], sizes = [32, 16], strides = [1, 1]} : vector<40x16xf32> to vector<32x16xf32>
    %39 = vector.extract_strided_slice %25 {offsets = [8, 0], sizes = [32, 3], strides = [1, 1]} : vector<40x3xf32> to vector<32x3xf32>
    %cst_10 = arith.constant dense<0.000000e+00> : vector<32x32xf32>
    %40 = tpu.matmul %38, %12, %cst_10 {dimension_numbers = #tpu.dot_dimension_numbers<[1], [0], [0], [1], [0, 0, 1, 1], [], []>} : vector<32x16xf32>, vector<16x32xf32>, vector<32x32xf32> -> vector<32x32xf32>
    %41 = vector.broadcast %13 : vector<1x32xf32> to vector<32x32xf32>
    %42 = arith.addf %40, %41 : vector<32x32xf32>
    %cst_11 = arith.constant 0.000000e+00 : f32
    %43 = vector.broadcast %cst_11 : f32 to vector<32x32xf32>
    %44 = arith.maximumf %42, %43 : vector<32x32xf32>
    %cst_12 = arith.constant dense<0.000000e+00> : vector<32x3xf32>
    %45 = tpu.matmul %44, %14, %cst_12 {dimension_numbers = #tpu.dot_dimension_numbers<[1], [0], [0], [1], [0, 0, 1, 1], [], []>} : vector<32x32xf32>, vector<32x3xf32>, vector<32x3xf32> -> vector<32x3xf32>
    %46 = vector.broadcast %15 : vector<1x3xf32> to vector<32x3xf32>
    %47 = arith.addf %45, %46 : vector<32x3xf32>
    %cst_13 = arith.constant dense<0.000000e+00> : vector<16x16xf32>
    %48 = tpu.matmul %16, %16, %cst_13 {dimension_numbers = #tpu.dot_dimension_numbers<[1], [0], [0], [1], [0, 0, 1, 1], [], []>} : vector<16x16xf32>, vector<16x16xf32>, vector<16x16xf32> -> vector<16x16xf32>
    %cst_14 = arith.constant dense<0.000000e+00> : vector<16x16xf32>
    %49 = tpu.matmul %48, %16, %cst_14 {dimension_numbers = #tpu.dot_dimension_numbers<[1], [0], [0], [1], [0, 0, 1, 1], [], []>} : vector<16x16xf32>, vector<16x16xf32>, vector<16x16xf32> -> vector<16x16xf32>
    %cst_15 = arith.constant dense<0.000000e+00> : vector<16x16xf32>
    %50 = tpu.matmul %49, %16, %cst_15 {dimension_numbers = #tpu.dot_dimension_numbers<[1], [0], [0], [1], [0, 0, 1, 1], [], []>} : vector<16x16xf32>, vector<16x16xf32>, vector<16x16xf32> -> vector<16x16xf32>
    %51 = tpu.iota {dimensions = array<i32: 0>} : vector<16x16xi32>
    %52 = tpu.iota {dimensions = array<i32: 1>} : vector<16x16xi32>
    %53 = arith.cmpi eq, %51, %52 : vector<16x16xi32>
    %cst_16 = arith.constant 1.000000e+00 : f32
    %cst_17 = arith.constant 0.000000e+00 : f32
    %54 = vector.broadcast %cst_16 : f32 to vector<16x16xf32>
    %55 = vector.broadcast %cst_17 : f32 to vector<16x16xf32>
    %56 = arith.select %53, %54, %55 : vector<16x16xi1>, vector<16x16xf32>
    %57 = tpu.concatenate %16, %48, %49, %50 in 1 : vector<16x16xf32>, vector<16x16xf32>, vector<16x16xf32>, vector<16x16xf32> -> vector<16x64xf32>
    %cst_18 = arith.constant 0.000000e+00 : f32
    %58 = vector.broadcast %cst_18 : f32 to vector<16x16xf32>
    %59 = tpu.concatenate %56, %16, %48, %49 in 1 : vector<16x16xf32>, vector<16x16xf32>, vector<16x16xf32>, vector<16x16xf32> -> vector<16x64xf32>
    %60 = tpu.concatenate %58, %56, %16, %48 in 1 : vector<16x16xf32>, vector<16x16xf32>, vector<16x16xf32>, vector<16x16xf32> -> vector<16x64xf32>
    %61 = tpu.concatenate %58, %58, %56, %16 in 1 : vector<16x16xf32>, vector<16x16xf32>, vector<16x16xf32>, vector<16x16xf32> -> vector<16x64xf32>
    %62 = tpu.concatenate %58, %58, %58, %56 in 1 : vector<16x16xf32>, vector<16x16xf32>, vector<16x16xf32>, vector<16x16xf32> -> vector<16x64xf32>
    %63 = tpu.concatenate %59, %60, %61, %62 in 0 : vector<16x64xf32>, vector<16x64xf32>, vector<16x64xf32>, vector<16x64xf32> -> vector<64x64xf32>
    %cst_19 = arith.constant 0.000000e+00 : f32
    %64 = vector.broadcast %cst_19 : f32 to vector<2x16xf32>
    %65 = tpu.concatenate %17, %64, %64, %64 in 1 : vector<2x16xf32>, vector<2x16xf32>, vector<2x16xf32>, vector<2x16xf32> -> vector<2x64xf32>
    %66 = tpu.concatenate %64, %17, %64, %64 in 1 : vector<2x16xf32>, vector<2x16xf32>, vector<2x16xf32>, vector<2x16xf32> -> vector<2x64xf32>
    %67 = tpu.concatenate %64, %64, %17, %64 in 1 : vector<2x16xf32>, vector<2x16xf32>, vector<2x16xf32>, vector<2x16xf32> -> vector<2x64xf32>
    %68 = tpu.concatenate %64, %64, %64, %17 in 1 : vector<2x16xf32>, vector<2x16xf32>, vector<2x16xf32>, vector<2x16xf32> -> vector<2x64xf32>
    %69 = tpu.concatenate %65, %66, %67, %68 in 0 : vector<2x64xf32>, vector<2x64xf32>, vector<2x64xf32>, vector<2x64xf32> -> vector<8x64xf32>
    %cst_20 = arith.constant dense<0.000000e+00> : vector<8x64xf32>
    %70 = tpu.matmul %28, %69, %cst_20 {dimension_numbers = #tpu.dot_dimension_numbers<[1], [0], [0], [1], [0, 0, 1, 1], [], []>} : vector<8x8xf32>, vector<8x64xf32>, vector<8x64xf32> -> vector<8x64xf32>
    %cst_21 = arith.constant dense<0.000000e+00> : vector<8x64xf32>
    %71 = tpu.matmul %37, %57, %cst_21 {dimension_numbers = #tpu.dot_dimension_numbers<[1], [0], [0], [1], [0, 0, 1, 1], [], []>} : vector<8x16xf32>, vector<16x64xf32>, vector<8x64xf32> -> vector<8x64xf32>
    %cst_22 = arith.constant dense<0.000000e+00> : vector<8x64xf32>
    %72 = tpu.matmul %70, %63, %cst_22 {dimension_numbers = #tpu.dot_dimension_numbers<[1], [0], [0], [1], [0, 0, 1, 1], [], []>} : vector<8x64xf32>, vector<64x64xf32>, vector<8x64xf32> -> vector<8x64xf32>
    %73 = arith.addf %71, %72 : vector<8x64xf32>
    %74 = vector.extract_strided_slice %73 {offsets = [0, 0], sizes = [8, 16], strides = [1, 1]} : vector<8x64xf32> to vector<8x16xf32>
    %75 = vector.extract_strided_slice %73 {offsets = [0, 16], sizes = [8, 16], strides = [1, 1]} : vector<8x64xf32> to vector<8x16xf32>
    %76 = vector.extract_strided_slice %73 {offsets = [0, 32], sizes = [8, 16], strides = [1, 1]} : vector<8x64xf32> to vector<8x16xf32>
    %77 = vector.extract_strided_slice %73 {offsets = [0, 48], sizes = [8, 16], strides = [1, 1]} : vector<8x64xf32> to vector<8x16xf32>
    %78 = tpu.concatenate %74, %75, %76, %77 in 0 : vector<8x16xf32>, vector<8x16xf32>, vector<8x16xf32>, vector<8x16xf32> -> vector<32x16xf32>
    %cst_23 = arith.constant dense<0.000000e+00> : vector<32x32xf32>
    %79 = tpu.matmul %78, %12, %cst_23 {dimension_numbers = #tpu.dot_dimension_numbers<[1], [0], [0], [1], [0, 0, 1, 1], [], []>} : vector<32x16xf32>, vector<16x32xf32>, vector<32x32xf32> -> vector<32x32xf32>
    %80 = vector.broadcast %13 : vector<1x32xf32> to vector<32x32xf32>
    %81 = arith.addf %79, %80 : vector<32x32xf32>
    %cst_24 = arith.constant 0.000000e+00 : f32
    %82 = vector.broadcast %cst_24 : f32 to vector<32x32xf32>
    %83 = arith.maximumf %81, %82 : vector<32x32xf32>
    %cst_25 = arith.constant dense<0.000000e+00> : vector<32x3xf32>
    %84 = tpu.matmul %83, %14, %cst_25 {dimension_numbers = #tpu.dot_dimension_numbers<[1], [0], [0], [1], [0, 0, 1, 1], [], []>} : vector<32x32xf32>, vector<32x3xf32>, vector<32x3xf32> -> vector<32x3xf32>
    %85 = vector.broadcast %15 : vector<1x3xf32> to vector<32x3xf32>
    %86 = arith.addf %84, %85 : vector<32x3xf32>
    %87 = tpu.iota {dimensions = array<i32: 1>} : vector<1x3xi32>
    %c2_i32 = arith.constant 2 : i32
    %88 = vector.broadcast %c2_i32 : i32 to vector<1x3xi32>
    %89 = arith.cmpi slt, %87, %88 : vector<1x3xi32>
    %cst_26 = arith.constant 9.000000e+00 : f32
    %cst_27 = arith.constant 1.000000e+00 : f32
    %90 = vector.broadcast %cst_26 : f32 to vector<1x3xf32>
    %91 = vector.broadcast %cst_27 : f32 to vector<1x3xf32>
    %92 = arith.select %89, %90, %91 : vector<1x3xi1>, vector<1x3xf32>
    %93 = arith.subf %39, %86 : vector<32x3xf32>
    %94 = arith.subf %39, %47 : vector<32x3xf32>
    %95 = arith.subf %38, %78 : vector<32x16xf32>
    %96 = tpu.iota {dimensions = array<i32: 0>} : vector<8x1xi32>
    %c4_i32 = arith.constant 4 : i32
    %97 = vector.broadcast %c4_i32 : i32 to vector<8x1xi32>
    %98 = arith.cmpi slt, %96, %97 : vector<8x1xi32>
    %cst_28 = arith.constant 1.000000e+00 : f32
    %cst_29 = arith.constant 0.000000e+00 : f32
    %99 = vector.broadcast %cst_28 : f32 to vector<8x1xf32>
    %100 = vector.broadcast %cst_29 : f32 to vector<8x1xf32>
    %101 = arith.select %98, %99, %100 : vector<8x1xi1>, vector<8x1xf32>
    %102 = tpu.concatenate %101, %101, %101, %101 in 0 : vector<8x1xf32>, vector<8x1xf32>, vector<8x1xf32>, vector<8x1xf32> -> vector<32x1xf32>
    %103 = vector.broadcast %102 : vector<32x1xf32> to vector<32x3xf32>
    %104 = arith.mulf %93, %103 : vector<32x3xf32>
    %105 = vector.broadcast %102 : vector<32x1xf32> to vector<32x3xf32>
    %106 = arith.mulf %94, %105 : vector<32x3xf32>
    %107 = vector.broadcast %102 : vector<32x1xf32> to vector<32x16xf32>
    %108 = arith.mulf %95, %107 : vector<32x16xf32>
    %109 = arith.mulf %104, %104 : vector<32x3xf32>
    %110 = vector.broadcast %92 : vector<1x3xf32> to vector<32x3xf32>
    %111 = arith.mulf %109, %110 : vector<32x3xf32>
    %112 = vector.shape_cast %111 : vector<32x3xf32> to vector<1x32x3xf32>
    %cst_30 = arith.constant dense<0.000000e+00> : vector<1xf32>
    %113 = vector.multi_reduction <add>, %112, %cst_30 [1, 2] : vector<1x32x3xf32> to vector<1xf32>
    %114 = vector.shape_cast %113 : vector<1xf32> to vector<1x1x1xf32>
    %115 = vector.extract %114[0, 0, 0] : f32 from vector<1x1x1xf32>
    %116 = arith.mulf %106, %106 : vector<32x3xf32>
    %117 = vector.broadcast %92 : vector<1x3xf32> to vector<32x3xf32>
    %118 = arith.mulf %116, %117 : vector<32x3xf32>
    %119 = vector.shape_cast %118 : vector<32x3xf32> to vector<1x32x3xf32>
    %cst_31 = arith.constant dense<0.000000e+00> : vector<1xf32>
    %120 = vector.multi_reduction <add>, %119, %cst_31 [1, 2] : vector<1x32x3xf32> to vector<1xf32>
    %121 = vector.shape_cast %120 : vector<1xf32> to vector<1x1x1xf32>
    %122 = vector.extract %121[0, 0, 0] : f32 from vector<1x1x1xf32>
    %123 = arith.mulf %108, %108 : vector<32x16xf32>
    %124 = vector.shape_cast %123 : vector<32x16xf32> to vector<1x32x16xf32>
    %cst_32 = arith.constant dense<0.000000e+00> : vector<1xf32>
    %125 = vector.multi_reduction <add>, %124, %cst_32 [1, 2] : vector<1x32x16xf32> to vector<1xf32>
    %126 = vector.shape_cast %125 : vector<1xf32> to vector<1x1x1xf32>
    %127 = vector.extract %126[0, 0, 0] : f32 from vector<1x1x1xf32>
    %128 = math.absf %104 : vector<32x3xf32>
    %129 = vector.shape_cast %128 : vector<32x3xf32> to vector<4x8x3xf32>
    %130 = math.absf %106 : vector<32x3xf32>
    %131 = vector.shape_cast %130 : vector<32x3xf32> to vector<4x8x3xf32>
    %cst_33 = arith.constant dense<0xFF800000> : vector<4x8xf32>
    %132 = vector.multi_reduction <maximumf>, %129, %cst_33 [2] : vector<4x8x3xf32> to vector<4x8xf32>
    %133 = vector.shape_cast %132 : vector<4x8xf32> to vector<4x8x1xf32>
    %cst_34 = arith.constant dense<0xFF800000> : vector<4x1xf32>
    %134 = vector.multi_reduction <maximumf>, %133, %cst_34 [1] : vector<4x8x1xf32> to vector<4x1xf32>
    %135 = vector.shape_cast %134 : vector<4x1xf32> to vector<4x1x1xf32>
    %cst_35 = arith.constant dense<0xFF800000> : vector<4x8xf32>
    %136 = vector.multi_reduction <maximumf>, %131, %cst_35 [2] : vector<4x8x3xf32> to vector<4x8xf32>
    %137 = vector.shape_cast %136 : vector<4x8xf32> to vector<4x8x1xf32>
    %cst_36 = arith.constant dense<0xFF800000> : vector<4x1xf32>
    %138 = vector.multi_reduction <maximumf>, %137, %cst_36 [1] : vector<4x8x1xf32> to vector<4x1xf32>
    %139 = vector.shape_cast %138 : vector<4x1xf32> to vector<4x1x1xf32>
    %140 = vector.shape_cast %135 : vector<4x1x1xf32> to vector<1x4x1x1xf32>
    %cst_37 = arith.constant dense<0.000000e+00> : vector<1xf32>
    %141 = vector.multi_reduction <add>, %140, %cst_37 [1, 2, 3] : vector<1x4x1x1xf32> to vector<1xf32>
    %142 = vector.shape_cast %141 : vector<1xf32> to vector<1x1x1x1xf32>
    %143 = vector.extract %142[0, 0, 0, 0] : f32 from vector<1x1x1x1xf32>
    %144 = vector.shape_cast %139 : vector<4x1x1xf32> to vector<1x4x1x1xf32>
    %cst_38 = arith.constant dense<0.000000e+00> : vector<1xf32>
    %145 = vector.multi_reduction <add>, %144, %cst_38 [1, 2, 3] : vector<1x4x1x1xf32> to vector<1xf32>
    %146 = vector.shape_cast %145 : vector<1xf32> to vector<1x1x1x1xf32>
    %147 = vector.extract %146[0, 0, 0, 0] : f32 from vector<1x1x1x1xf32>
    %148 = arith.addf %143, %147 : f32
    %cst_39 = arith.constant 1.600000e+01 : f32
    %149 = arith.divf %115, %cst_39 : f32
    %cst_40 = arith.constant 1.600000e+01 : f32
    %150 = arith.divf %127, %cst_40 : f32
    %cst_41 = arith.constant 1.600000e+01 : f32
    %151 = arith.divf %122, %cst_41 : f32
    %cst_42 = arith.constant 1.600000e+01 : f32
    %152 = arith.divf %148, %cst_42 : f32
    %153 = vector.extract_strided_slice %7 {offsets = [0, 0], sizes = [56, 32], strides = [1, 1]} : vector<144x32xf32> to vector<56x32xf32>
    %154 = vector.extract_strided_slice %7 {offsets = [56, 0], sizes = [64, 32], strides = [1, 1]} : vector<144x32xf32> to vector<64x32xf32>
    %155 = arith.mulf %153, %153 : vector<56x32xf32>
    %156 = vector.shape_cast %155 : vector<56x32xf32> to vector<1x56x32xf32>
    %cst_43 = arith.constant dense<0.000000e+00> : vector<1xf32>
    %157 = vector.multi_reduction <add>, %156, %cst_43 [1, 2] : vector<1x56x32xf32> to vector<1xf32>
    %158 = vector.shape_cast %157 : vector<1xf32> to vector<1x1x1xf32>
    %159 = vector.extract %158[0, 0, 0] : f32 from vector<1x1x1xf32>
    %160 = arith.mulf %154, %154 : vector<64x32xf32>
    %161 = vector.shape_cast %160 : vector<64x32xf32> to vector<1x64x32xf32>
    %cst_44 = arith.constant dense<0.000000e+00> : vector<1xf32>
    %162 = vector.multi_reduction <add>, %161, %cst_44 [1, 2] : vector<1x64x32xf32> to vector<1xf32>
    %163 = vector.shape_cast %162 : vector<1xf32> to vector<1x1x1xf32>
    %164 = vector.extract %163[0, 0, 0] : f32 from vector<1x1x1xf32>
    %165 = arith.mulf %0, %151 : f32
    %166 = arith.mulf %1, %149 : f32
    %167 = arith.addf %165, %166 : f32
    %cst_45 = arith.constant 9.000000e+00 : f32
    %168 = arith.mulf %2, %cst_45 : f32
    %169 = arith.mulf %168, %150 : f32
    %170 = arith.addf %167, %169 : f32
    %cst_46 = arith.constant 9.000000e+00 : f32
    %171 = arith.mulf %3, %cst_46 : f32
    %172 = arith.mulf %171, %152 : f32
    %173 = arith.addf %170, %172 : f32
    %174 = arith.mulf %4, %159 : f32
    %175 = arith.addf %173, %174 : f32
    %176 = arith.mulf %5, %164 : f32
    %177 = arith.addf %175, %176 : f32
    %cst_47 = arith.constant 0.000000e+00 : f32
    %178 = arith.mulf %6, %cst_47 : f32
    %179 = arith.addf %177, %178 : f32
    %c0_48 = arith.constant 0 : index
    %c0_49 = arith.constant 0 : index
    %180 = memref.load %arg4[%c0_48, %c0_49] : memref<1x1xf32, #tpu.memory_space<smem>>
    memref.store %179, %arg4[%c0_48, %c0_49] : memref<1x1xf32, #tpu.memory_space<smem>>
    return
  }
}

</mosaic_0001>

<llo_original>
// kernel: tpu_custom_call.1
$region0: #{tpu_custom_call.1}
  #allocation0 [shape = 'u32[]', space=smem, size = 0x4, offset = 0x4, fixed_abs, tag = 'smem constant byte address 0x4 - core index']
  #allocation1 [shape = 'u32[144,128]{1,0:T(1,128)}', space=vmem, size = 0x12000, scoped, tag = 'internal scratch']
  %s0 = inlined_call_operand.vmem [shape: f32[8], index: 0, kind: input, shape index: {}]
  %s1 = inlined_call_operand.vmem [shape: f32[4,15], index: 1, kind: input, shape index: {}]
  %s2 = inlined_call_operand.vmem [shape: f32[4,8], index: 2, kind: input, shape index: {}]
  %s3 = inlined_call_operand.vmem [shape: f32[144,32], index: 3, kind: input, shape index: {}]
  %s4 = inlined_call_operand.hbm [shape: f32[1,1], index: 4, kind: output, shape index: {}]
  %s5 = sld [smem:[#allocation0]]
  $region30: #{tpu_custom_call.1} parent=0
    _
  %s7 = ssub.s32 1, %s5
  %s8 = scalar_select 0, %s7, %s5
  $region1: #{tpu_custom_call.1} parent=0
    #allocation2 [shape = 'u8[512]{0}', space=smem, size = 0x200, scoped, tag = 'input window, operand 0, single buffered']
    #allocation3 [shape = 's32[1]{0}', space=sflag, size = 0x4, scoped, tag = 'scoped memory for tpu_custom_call.1']
    #allocation4 [shape = 's32[1]{0}', space=sflag, size = 0x4, scoped, tag = 'scoped memory for tpu_custom_call.1']
    #allocation5 [shape = 'u8[512]{0}', space=smem, size = 0x200, scoped, tag = 'output window, operand 0, single buffered']
    %9 = vsyncpa [#allocation4], 0
    %10 = vsyncpa [#allocation3], 0
    // Predicated region
    $region2: #{tpu_custom_call.1} parent=1 // pred_check
      _
    $region3: #{tpu_custom_call.1} parent=1 // pred_check_branch
      %12 = sbr.rel (0) target = $region5
    $region4: #{tpu_custom_call.1} parent=1 // pred_region
      %s14 = ssub.s32 16, 16
      %15 = vsyncadd [#allocation4], %s14
      %s17 = sshll.u32 %s0, 4
      %s18 = int_to_ptr.vmem [resolvable:$true] %s17
      %20 = dma.vmem_to_smem %s18, 16, [#allocation2], [#allocation4]
    $region5: #{tpu_custom_call.1} parent=1 // pred_fallthru
      _
    // Predicated region
    $region6: #{tpu_custom_call.1} parent=1 // pred_check
      _
    $region7: #{tpu_custom_call.1} parent=1 // pred_check_branch
      %22 = sbr.rel (0) target = $region9
    $region8: #{tpu_custom_call.1} parent=1 // pred_region
      _
    $region9: #{tpu_custom_call.1} parent=1 // pred_fallthru
      _
    // Predicated region
    $region10: #{tpu_custom_call.1} parent=1 // pred_check
      _
    $region11: #{tpu_custom_call.1} parent=1 // pred_check_branch
      %24 = sbr.rel (0) target = $region13
    $region12: #{tpu_custom_call.1} parent=1 // pred_region
      _
    $region13: #{tpu_custom_call.1} parent=1 // pred_fallthru
      _
    // Predicated region
    $region14: #{tpu_custom_call.1} parent=1 // pred_check
      _
    $region15: #{tpu_custom_call.1} parent=1 // pred_check_branch
      %26 = sbr.rel (0) target = $region17
    $region16: #{tpu_custom_call.1} parent=1 // pred_region
      _
    $region17: #{tpu_custom_call.1} parent=1 // pred_fallthru
      _
    // Predicated region
    $region18: #{tpu_custom_call.1} parent=1 // pred_check
      _
    $region19: #{tpu_custom_call.1} parent=1 // pred_check_branch
      %28 = sbr.rel (0) target = $region21
    $region20: #{tpu_custom_call.1} parent=1 // pred_region
      %29 = dma.done [#allocation4], 16
    $region21: #{tpu_custom_call.1} parent=1 // pred_fallthru
      _
    %30 = sfence
    %s31 = sld [smem:[#allocation2]]
    %s32 = sld [smem:[#allocation2 + $0x1]]
    %s33 = sld [smem:[#allocation2 + $0x2]]
    %s34 = sld [smem:[#allocation2 + $0x3]]
    %s35 = sld [smem:[#allocation2 + $0x4]]
    %s36 = sld [smem:[#allocation2 + $0x5]]
    %s37 = sld [smem:[#allocation2 + $0x6]]
    %v38 = vld [vmem:[%s3] sm:$0xff]
    %v39 = vld [vmem:[%s3 + $0x8] sm:$0xff]
    %v40 = vld [vmem:[%s3 + $0x10] sm:$0xff]
    %v41 = vld [vmem:[%s3 + $0x18] sm:$0xff]
    %v42 = vld [vmem:[%s3 + $0x20] sm:$0xff]
    %v43 = vld [vmem:[%s3 + $0x28] sm:$0xff]
    %v44 = vld [vmem:[%s3 + $0x30] sm:$0xff]
    %v45 = vld [vmem:[%s3 + $0x38] sm:$0xff]
    %v46 = vld [vmem:[%s3 + $0x40] sm:$0xff]
    %v47 = vld [vmem:[%s3 + $0x48] sm:$0xff]
    %v48 = vld [vmem:[%s3 + $0x50] sm:$0xff]
    %v49 = vld [vmem:[%s3 + $0x58] sm:$0xff]
    %v50 = vld [vmem:[%s3 + $0x60] sm:$0xff]
    %v51 = vld [vmem:[%s3 + $0x68] sm:$0xff]
    %v52 = vld [vmem:[%s3 + $0x70] sm:$0xff]
    %v53 = vld [vmem:[%s3 + $0x78] sm:$0xff]
    %v54 = vld [vmem:[%s3 + $0x80] sm:$0xff]
    %v55 = vld [vmem:[%s3 + $0x88] sm:$0xff]
    %v56 = vld [vmem:[%s1] sm:$0xf]
    %58 = vrot.lane.b32.xlu0 %v56, 125
    %v59 = vpop.permute.xlu0 %58
    %61 = vrot.lane.b32.xlu0 %v56, 122
    %v62 = vpop.permute.xlu0 %61
    %64 = vrot.lane.b32.xlu0 %v56, 119
    %v65 = vpop.permute.xlu0 %64
    %67 = vrot.lane.b32.xlu0 %v56, 116
    %v68 = vpop.permute.xlu0 %67
    %vm70 = vcmask 1043456
    %v71 = vsel %vm70, %v56, 0.0
    %v72 = vsel %vm70, %v59, 0.0
    %v73 = vsel %vm70, %v62, 0.0
    %v74 = vsel %vm70, %v65, 0.0
    %v75 = vsel %vm70, %v68, 0.0
    %v76 = vld [vmem:[%s2] sm:$0xf]
    %v77 = vsel %vm70, %v76, 0.0
    %v78 = vlaneseq
    %v79 = vshrl.u32 %v78, 7
    %v80 = vsub.s32 0, %v79
    %v81 = vrot.slane %v39, %v80
    %vm82 = vcmask 23552
    %v84 = vsel %vm82, %v71, 0
    %v87 = vsel %vm82, %v72, 0
    %v90 = vsel %vm82, %v73, 0
    %v93 = vsel %vm82, %v74, 0
    %v96 = vsel %vm82, %v75, 0
    %vm98 = vcmask 1042432
    %v100 = vsel %vm98, %v38, 0
    %102 = vmatprep.subr.mxu0 0.0
    %103 = vmatpush1.msra.mxu0 %v100
    %104 = vmatprep.subr.mxu0 0.0
    %105 = vmatpush1.msra.mxu0 0.0
    %106 = vmatprep.subr.mxu0 0.0
    %107 = vmatpush1.msra.mxu0 0.0
    %108 = vmatprep.subr.mxu0 0.0
    %109 = vmatpush1.msra.mxu0 0.0
    %110 = vmatprep.subr.mxu0 0.0
    %111 = vmatpush1.msra.mxu0 0.0
    %112 = vmatprep.subr.mxu0 0.0
    %113 = vmatpush1.msra.mxu0 0.0
    %114 = vmatprep.subr.mxu0 0.0
    %115 = vmatpush1.msra.mxu0 0.0
    %116 = vmatprep.subr.mxu0 0.0
    %117 = vmatpush1.msra.mxu0 0.0
    %118 = vmatprep.subr.mxu0 0.0
    %119 = vmatpush1.msra.mxu0 0.0
    %120 = vmatprep.subr.mxu0 0.0
    %121 = vmatpush1.msra.mxu0 0.0
    %122 = vmatprep.subr.mxu0 0.0
    %123 = vmatpush1.msra.mxu0 0.0
    %124 = vmatprep.subr.mxu0 0.0
    %125 = vmatpush1.msra.mxu0 0.0
    %126 = vmatprep.subr.mxu0 0.0
    %127 = vmatpush1.msra.mxu0 0.0
    %128 = vmatprep.subr.mxu0 0.0
    %129 = vmatpush1.msra.mxu0 0.0
    %130 = vmatprep.subr.mxu0 0.0
    %131 = vmatpush1.msra.mxu0 0.0
    %132 = vmatprep.subr.mxu0 0.0
    %133 = vmatpush1.msra.mxu0 0.0
    %134 = vmatprep.subr.mxu0 0.0
    %135 = vmatpush1.msra.mxu0 0.0
    %136 = vmatprep.subr.mxu0 0.0
    %137 = vmatpush1.msra.mxu0 0.0
    %138 = vmatprep.subr.mxu0 0.0
    %139 = vmatpush1.msra.mxu0 0.0
    %140 = vmatprep.subr.mxu0 0.0
    %141 = vmatpush1.msra.mxu0 0.0
    %142 = vmatprep.subr.mxu0 0.0
    %143 = vmatpush1.msra.mxu0 0.0
    %144 = vmatprep.subr.mxu0 0.0
    %145 = vmatpush1.msra.mxu0 0.0
    %146 = vmatprep.subr.mxu0 0.0
    %147 = vmatpush1.msra.mxu0 0.0
    %148 = vmatprep.subr.mxu0 0.0
    %149 = vmatpush1.msra.mxu0 0.0
    %150 = vmatprep.subr.mxu0 0.0
    %151 = vmatpush1.msra.mxu0 0.0
    %152 = vmatprep.subr.mxu0 0.0
    %153 = vmatpush1.msra.mxu0 0.0
    %154 = vmatprep.subr.mxu0 0.0
    %155 = vmatpush1.msra.mxu0 0.0
    %156 = vmatprep.subr.mxu0 0.0
    %157 = vmatpush1.msra.mxu0 0.0
    %158 = vmatprep.subr.mxu0 0.0
    %159 = vmatpush1.msra.mxu0 0.0
    %160 = vmatprep.subr.mxu0 0.0
    %161 = vmatpush1.msra.mxu0 0.0
    %162 = vmatprep.subr.mxu0 0.0
    %163 = vmatpush1.msra.mxu0 0.0
    %164 = vmatprep.subr.mxu0 0.0
    %165 = vmatpush1.msra.mxu0 0.0
    %166 = vmatprep.mubr.f32.mxu0 0.0
    %167 = vmatmul.mubr.f32.gmra.mrb[0].mxu0 %v84
    %v168 = vpop.f32.mrb[0].mxu0
    %v169 = vadd.f32 %v81, %v168
    %v170 = vpop.f32.mrb[0].mxu0
    %171 = vmatprep.mubr.f32.mxu0 0.0
    %172 = vmatmul.mubr.f32.gmra.mrb[0].mxu0 %v87
    %v173 = vpop.f32.mrb[0].mxu0
    %v174 = vadd.f32 %v81, %v173
    %v175 = vpop.f32.mrb[0].mxu0
    %176 = vmatprep.mubr.f32.mxu0 0.0
    %177 = vmatmul.mubr.f32.gmra.mrb[0].mxu0 %v90
    %v178 = vpop.f32.mrb[0].mxu0
    %v179 = vadd.f32 %v81, %v178
    %v180 = vpop.f32.mrb[0].mxu0
    %181 = vmatprep.mubr.f32.mxu0 0.0
    %182 = vmatmul.mubr.f32.gmra.mrb[0].mxu0 %v93
    %v183 = vpop.f32.mrb[0].mxu0
    %v184 = vadd.f32 %v81, %v183
    %v185 = vpop.f32.mrb[0].mxu0
    %186 = vmatprep.mubr.f32.mxu0 0.0
    %187 = vmatmul.mubr.f32.gmra.mrb[0].mxu0 %v96
    %v188 = vpop.f32.mrb[0].mxu0
    %v189 = vadd.f32 %v81, %v188
    %v190 = vpop.f32.mrb[0].mxu0
    %191 = vdwg.mxu0
    %v192 = vmax.f32 %v169, 0.0
    %v193 = vmax.f32 %v174, 0.0
    %v194 = vmax.f32 %v179, 0.0
    %v195 = vmax.f32 %v184, 0.0
    %v196 = vmax.f32 %v189, 0.0
    %v197 = vlaneseq
    %v198 = vshrl.u32 %v197, 7
    %v199 = vsub.s32 0, %v198
    %v200 = vrot.slane %v44, %v199
    %vm201 = vcmask 261120
    %v203 = vsel %vm201, %v192, 0
    %v206 = vsel %vm201, %v193, 0
    %v209 = vsel %vm201, %v194, 0
    %v212 = vsel %vm201, %v195, 0
    %v215 = vsel %vm201, %v196, 0
    %217 = vmatprep.subr.mxu0 0.0
    %218 = vmatpush1.msra.mxu0 %v40
    %219 = vmatprep.subr.mxu0 0.0
    %220 = vmatpush1.msra.mxu0 %v41
    %221 = vmatprep.subr.mxu0 0.0
    %222 = vmatpush1.msra.mxu0 %v42
    %223 = vmatprep.subr.mxu0 0.0
    %224 = vmatpush1.msra.mxu0 %v43
    %225 = vmatprep.subr.mxu0 0.0
    %226 = vmatpush1.msra.mxu0 0.0
    %227 = vmatprep.subr.mxu0 0.0
    %228 = vmatpush1.msra.mxu0 0.0
    %229 = vmatprep.subr.mxu0 0.0
    %230 = vmatpush1.msra.mxu0 0.0
    %231 = vmatprep.subr.mxu0 0.0
    %232 = vmatpush1.msra.mxu0 0.0
    %233 = vmatprep.subr.mxu0 0.0
    %234 = vmatpush1.msra.mxu0 0.0
    %235 = vmatprep.subr.mxu0 0.0
    %236 = vmatpush1.msra.mxu0 0.0
    %237 = vmatprep.subr.mxu0 0.0
    %238 = vmatpush1.msra.mxu0 0.0
    %239 = vmatprep.subr.mxu0 0.0
    %240 = vmatpush1.msra.mxu0 0.0
    %241 = vmatprep.subr.mxu0 0.0
    %242 = vmatpush1.msra.mxu0 0.0
    %243 = vmatprep.subr.mxu0 0.0
    %244 = vmatpush1.msra.mxu0 0.0
    %245 = vmatprep.subr.mxu0 0.0
    %246 = vmatpush1.msra.mxu0 0.0
    %247 = vmatprep.subr.mxu0 0.0
    %248 = vmatpush1.msra.mxu0 0.0
    %249 = vmatprep.subr.mxu0 0.0
    %250 = vmatpush1.msra.mxu0 0.0
    %251 = vmatprep.subr.mxu0 0.0
    %252 = vmatpush1.msra.mxu0 0.0
    %253 = vmatprep.subr.mxu0 0.0
    %254 = vmatpush1.msra.mxu0 0.0
    %255 = vmatprep.subr.mxu0 0.0
    %256 = vmatpush1.msra.mxu0 0.0
    %257 = vmatprep.subr.mxu0 0.0
    %258 = vmatpush1.msra.mxu0 0.0
    %259 = vmatprep.subr.mxu0 0.0
    %260 = vmatpush1.msra.mxu0 0.0
    %261 = vmatprep.subr.mxu0 0.0
    %262 = vmatpush1.msra.mxu0 0.0
    %263 = vmatprep.subr.mxu0 0.0
    %264 = vmatpush1.msra.mxu0 0.0
    %265 = vmatprep.subr.mxu0 0.0
    %266 = vmatpush1.msra.mxu0 0.0
    %267 = vmatprep.subr.mxu0 0.0
    %268 = vmatpush1.msra.mxu0 0.0
    %269 = vmatprep.subr.mxu0 0.0
    %270 = vmatpush1.msra.mxu0 0.0
    %271 = vmatprep.subr.mxu0 0.0
    %272 = vmatpush1.msra.mxu0 0.0
    %273 = vmatprep.subr.mxu0 0.0
    %274 = vmatpush1.msra.mxu0 0.0
    %275 = vmatprep.subr.mxu0 0.0
    %276 = vmatpush1.msra.mxu0 0.0
    %277 = vmatprep.subr.mxu0 0.0
    %278 = vmatpush1.msra.mxu0 0.0
    %279 = vmatprep.subr.mxu0 0.0
    %280 = vmatpush1.msra.mxu0 0.0
    %281 = vmatprep.mubr.f32.mxu0 0.0
    %282 = vmatmul.mubr.f32.gmra.mrb[0].mxu0 %v203
    %v283 = vpop.f32.mrb[0].mxu0
    %v284 = vadd.f32 %v200, %v283
    %v285 = vpop.f32.mrb[0].mxu0
    %286 = vmatprep.mubr.f32.mxu0 0.0
    %287 = vmatmul.mubr.f32.gmra.mrb[0].mxu0 %v206
    %v288 = vpop.f32.mrb[0].mxu0
    %v289 = vadd.f32 %v200, %v288
    %v290 = vpop.f32.mrb[0].mxu0
    %291 = vmatprep.mubr.f32.mxu0 0.0
    %292 = vmatmul.mubr.f32.gmra.mrb[0].mxu0 %v209
    %v293 = vpop.f32.mrb[0].mxu0
    %v294 = vadd.f32 %v200, %v293
    %v295 = vpop.f32.mrb[0].mxu0
    %296 = vmatprep.mubr.f32.mxu0 0.0
    %297 = vmatmul.mubr.f32.gmra.mrb[0].mxu0 %v212
    %v298 = vpop.f32.mrb[0].mxu0
    %v299 = vadd.f32 %v200, %v298
    %v300 = vpop.f32.mrb[0].mxu0
    %301 = vmatprep.mubr.f32.mxu0 0.0
    %302 = vmatmul.mubr.f32.gmra.mrb[0].mxu0 %v215
    %v303 = vpop.f32.mrb[0].mxu0
    %v304 = vadd.f32 %v200, %v303
    %v305 = vpop.f32.mrb[0].mxu0
    %306 = vdwg.mxu0
    %v307 = vlaneseq
    %v308 = vshrl.u32 %v307, 7
    %v309 = vsub.s32 0, %v308
    %v310 = vrot.slane %v47, %v309
    %vm311 = vcmask 130048
    %v313 = vsel %vm311, %v289, 0
    %v316 = vsel %vm311, %v294, 0
    %v319 = vsel %vm311, %v299, 0
    %v322 = vsel %vm311, %v304, 0
    %324 = vmatprep.subr.mxu0 0.0
    %325 = vmatpush1.msra.mxu0 %v45
    %326 = vmatprep.subr.mxu0 0.0
    %327 = vmatpush1.msra.mxu0 %v46
    %328 = vmatprep.subr.mxu0 0.0
    %329 = vmatpush1.msra.mxu0 0.0
    %330 = vmatprep.subr.mxu0 0.0
    %331 = vmatpush1.msra.mxu0 0.0
    %332 = vmatprep.subr.mxu0 0.0
    %333 = vmatpush1.msra.mxu0 0.0
    %334 = vmatprep.subr.mxu0 0.0
    %335 = vmatpush1.msra.mxu0 0.0
    %336 = vmatprep.subr.mxu0 0.0
    %337 = vmatpush1.msra.mxu0 0.0
    %338 = vmatprep.subr.mxu0 0.0
    %339 = vmatpush1.msra.mxu0 0.0
    %340 = vmatprep.subr.mxu0 0.0
    %341 = vmatpush1.msra.mxu0 0.0
    %342 = vmatprep.subr.mxu0 0.0
    %343 = vmatpush1.msra.mxu0 0.0
    %344 = vmatprep.subr.mxu0 0.0
    %345 = vmatpush1.msra.mxu0 0.0
    %346 = vmatprep.subr.mxu0 0.0
    %347 = vmatpush1.msra.mxu0 0.0
    %348 = vmatprep.subr.mxu0 0.0
    %349 = vmatpush1.msra.mxu0 0.0
    %350 = vmatprep.subr.mxu0 0.0
    %351 = vmatpush1.msra.mxu0 0.0
    %352 = vmatprep.subr.mxu0 0.0
    %353 = vmatpush1.msra.mxu0 0.0
    %354 = vmatprep.subr.mxu0 0.0
    %355 = vmatpush1.msra.mxu0 0.0
    %356 = vmatprep.subr.mxu0 0.0
    %357 = vmatpush1.msra.mxu0 0.0
    %358 = vmatprep.subr.mxu0 0.0
    %359 = vmatpush1.msra.mxu0 0.0
    %360 = vmatprep.subr.mxu0 0.0
    %361 = vmatpush1.msra.mxu0 0.0
    %362 = vmatprep.subr.mxu0 0.0
    %363 = vmatpush1.msra.mxu0 0.0
    %364 = vmatprep.subr.mxu0 0.0
    %365 = vmatpush1.msra.mxu0 0.0
    %366 = vmatprep.subr.mxu0 0.0
    %367 = vmatpush1.msra.mxu0 0.0
    %368 = vmatprep.subr.mxu0 0.0
    %369 = vmatpush1.msra.mxu0 0.0
    %370 = vmatprep.subr.mxu0 0.0
    %371 = vmatpush1.msra.mxu0 0.0
    %372 = vmatprep.subr.mxu0 0.0
    %373 = vmatpush1.msra.mxu0 0.0
    %374 = vmatprep.subr.mxu0 0.0
    %375 = vmatpush1.msra.mxu0 0.0
    %376 = vmatprep.subr.mxu0 0.0
    %377 = vmatpush1.msra.mxu0 0.0
    %378 = vmatprep.subr.mxu0 0.0
    %379 = vmatpush1.msra.mxu0 0.0
    %380 = vmatprep.subr.mxu0 0.0
    %381 = vmatpush1.msra.mxu0 0.0
    %382 = vmatprep.subr.mxu0 0.0
    %383 = vmatpush1.msra.mxu0 0.0
    %384 = vmatprep.subr.mxu0 0.0
    %385 = vmatpush1.msra.mxu0 0.0
    %386 = vmatprep.subr.mxu0 0.0
    %387 = vmatpush1.msra.mxu0 0.0
    %388 = vmatprep.mubr.f32.mxu0 0.0
    %389 = vmatmul.mubr.f32.gmra.mrb[0].mxu0 %v313
    %v390 = vpop.f32.mrb[0].mxu0
    %v391 = vadd.f32 %v310, %v390
    %v392 = vpop.f32.mrb[0].mxu0
    %393 = vmatprep.mubr.f32.mxu0 0.0
    %394 = vmatmul.mubr.f32.gmra.mrb[0].mxu0 %v316
    %v395 = vpop.f32.mrb[0].mxu0
    %v396 = vadd.f32 %v310, %v395
    %v397 = vpop.f32.mrb[0].mxu0
    %398 = vmatprep.mubr.f32.mxu0 0.0
    %399 = vmatmul.mubr.f32.gmra.mrb[0].mxu0 %v319
    %v400 = vpop.f32.mrb[0].mxu0
    %v401 = vadd.f32 %v310, %v400
    %v402 = vpop.f32.mrb[0].mxu0
    %403 = vmatprep.mubr.f32.mxu0 0.0
    %404 = vmatmul.mubr.f32.gmra.mrb[0].mxu0 %v322
    %v405 = vpop.f32.mrb[0].mxu0
    %v406 = vadd.f32 %v310, %v405
    %v407 = vpop.f32.mrb[0].mxu0
    %408 = vdwg.mxu0
    %v409 = vmax.f32 %v391, 0.0
    %v410 = vmax.f32 %v396, 0.0
    %v411 = vmax.f32 %v401, 0.0
    %v412 = vmax.f32 %v406, 0.0
    %v413 = vlaneseq
    %v414 = vshrl.u32 %v413, 7
    %v415 = vsub.s32 0, %v414
    %v416 = vrot.slane %v52, %v415
    %v418 = vsel %vm201, %v409, 0
    %v421 = vsel %vm201, %v410, 0
    %v424 = vsel %vm201, %v411, 0
    %v427 = vsel %vm201, %v412, 0
    %429 = vmatprep.subr.mxu0 0.0
    %430 = vmatpush1.msra.mxu0 %v48
    %431 = vmatprep.subr.mxu0 0.0
    %432 = vmatpush1.msra.mxu0 %v49
    %433 = vmatprep.subr.mxu0 0.0
    %434 = vmatpush1.msra.mxu0 %v50
    %435 = vmatprep.subr.mxu0 0.0
    %436 = vmatpush1.msra.mxu0 %v51
    %437 = vmatprep.subr.mxu0 0.0
    %438 = vmatpush1.msra.mxu0 0.0
    %439 = vmatprep.subr.mxu0 0.0
    %440 = vmatpush1.msra.mxu0 0.0
    %441 = vmatprep.subr.mxu0 0.0
    %442 = vmatpush1.msra.mxu0 0.0
    %443 = vmatprep.subr.mxu0 0.0
    %444 = vmatpush1.msra.mxu0 0.0
    %445 = vmatprep.subr.mxu0 0.0
    %446 = vmatpush1.msra.mxu0 0.0
    %447 = vmatprep.subr.mxu0 0.0
    %448 = vmatpush1.msra.mxu0 0.0
    %449 = vmatprep.subr.mxu0 0.0
    %450 = vmatpush1.msra.mxu0 0.0
    %451 = vmatprep.subr.mxu0 0.0
    %452 = vmatpush1.msra.mxu0 0.0
    %453 = vmatprep.subr.mxu0 0.0
    %454 = vmatpush1.msra.mxu0 0.0
    %455 = vmatprep.subr.mxu0 0.0
    %456 = vmatpush1.msra.mxu0 0.0
    %457 = vmatprep.subr.mxu0 0.0
    %458 = vmatpush1.msra.mxu0 0.0
    %459 = vmatprep.subr.mxu0 0.0
    %460 = vmatpush1.msra.mxu0 0.0
    %461 = vmatprep.subr.mxu0 0.0
    %462 = vmatpush1.msra.mxu0 0.0
    %463 = vmatprep.subr.mxu0 0.0
    %464 = vmatpush1.msra.mxu0 0.0
    %465 = vmatprep.subr.mxu0 0.0
    %466 = vmatpush1.msra.mxu0 0.0
    %467 = vmatprep.subr.mxu0 0.0
    %468 = vmatpush1.msra.mxu0 0.0
    %469 = vmatprep.subr.mxu0 0.0
    %470 = vmatpush1.msra.mxu0 0.0
    %471 = vmatprep.subr.mxu0 0.0
    %472 = vmatpush1.msra.mxu0 0.0
    %473 = vmatprep.subr.mxu0 0.0
    %474 = vmatpush1.msra.mxu0 0.0
    %475 = vmatprep.subr.mxu0 0.0
    %476 = vmatpush1.msra.mxu0 0.0
    %477 = vmatprep.subr.mxu0 0.0
    %478 = vmatpush1.msra.mxu0 0.0
    %479 = vmatprep.subr.mxu0 0.0
    %480 = vmatpush1.msra.mxu0 0.0
    %481 = vmatprep.subr.mxu0 0.0
    %482 = vmatpush1.msra.mxu0 0.0
    %483 = vmatprep.subr.mxu0 0.0
    %484 = vmatpush1.msra.mxu0 0.0
    %485 = vmatprep.subr.mxu0 0.0
    %486 = vmatpush1.msra.mxu0 0.0
    %487 = vmatprep.subr.mxu0 0.0
    %488 = vmatpush1.msra.mxu0 0.0
    %489 = vmatprep.subr.mxu0 0.0
    %490 = vmatpush1.msra.mxu0 0.0
    %491 = vmatprep.subr.mxu0 0.0
    %492 = vmatpush1.msra.mxu0 0.0
    %493 = vmatprep.mubr.f32.mxu0 0.0
    %494 = vmatmul.mubr.f32.gmra.mrb[0].mxu0 %v418
    %v495 = vpop.f32.mrb[0].mxu0
    %v496 = vadd.f32 %v416, %v495
    %v497 = vpop.f32.mrb[0].mxu0
    %498 = vmatprep.mubr.f32.mxu0 0.0
    %499 = vmatmul.mubr.f32.gmra.mrb[0].mxu0 %v421
    %v500 = vpop.f32.mrb[0].mxu0
    %v501 = vadd.f32 %v416, %v500
    %v502 = vpop.f32.mrb[0].mxu0
    %503 = vmatprep.mubr.f32.mxu0 0.0
    %504 = vmatmul.mubr.f32.gmra.mrb[0].mxu0 %v424
    %v505 = vpop.f32.mrb[0].mxu0
    %v506 = vadd.f32 %v416, %v505
    %v507 = vpop.f32.mrb[0].mxu0
    %508 = vmatprep.mubr.f32.mxu0 0.0
    %509 = vmatmul.mubr.f32.gmra.mrb[0].mxu0 %v427
    %v510 = vpop.f32.mrb[0].mxu0
    %v511 = vadd.f32 %v416, %v510
    %v512 = vpop.f32.mrb[0].mxu0
    %513 = vdwg.mxu0
    %v515 = vsel %vm311, %v53, 0
    %v518 = vsel %vm311, %v54, 0
    %520 = vmatprep.subr.mxu0 0.0
    %521 = vmatpush1.msra.mxu0 %v53
    %522 = vmatprep.subr.mxu0 0.0
    %523 = vmatpush1.msra.mxu0 %v54
    %524 = vmatprep.subr.mxu0 0.0
    %525 = vmatpush1.msra.mxu0 0.0
    %526 = vmatprep.subr.mxu0 0.0
    %527 = vmatpush1.msra.mxu0 0.0
    %528 = vmatprep.subr.mxu0 0.0
    %529 = vmatpush1.msra.mxu0 0.0
    %530 = vmatprep.subr.mxu0 0.0
    %531 = vmatpush1.msra.mxu0 0.0
    %532 = vmatprep.subr.mxu0 0.0
    %533 = vmatpush1.msra.mxu0 0.0
    %534 = vmatprep.subr.mxu0 0.0
    %535 = vmatpush1.msra.mxu0 0.0
    %536 = vmatprep.subr.mxu0 0.0
    %537 = vmatpush1.msra.mxu0 0.0
    %538 = vmatprep.subr.mxu0 0.0
    %539 = vmatpush1.msra.mxu0 0.0
    %540 = vmatprep.subr.mxu0 0.0
    %541 = vmatpush1.msra.mxu0 0.0
    %542 = vmatprep.subr.mxu0 0.0
    %543 = vmatpush1.msra.mxu0 0.0
    %544 = vmatprep.subr.mxu0 0.0
    %545 = vmatpush1.msra.mxu0 0.0
    %546 = vmatprep.subr.mxu0 0.0
    %547 = vmatpush1.msra.mxu0 0.0
    %548 = vmatprep.subr.mxu0 0.0
    %549 = vmatpush1.msra.mxu0 0.0
    %550 = vmatprep.subr.mxu0 0.0
    %551 = vmatpush1.msra.mxu0 0.0
    %552 = vmatprep.subr.mxu0 0.0
    %553 = vmatpush1.msra.mxu0 0.0
    %554 = vmatprep.subr.mxu0 0.0
    %555 = vmatpush1.msra.mxu0 0.0
    %556 = vmatprep.subr.mxu0 0.0
    %557 = vmatpush1.msra.mxu0 0.0
    %558 = vmatprep.subr.mxu0 0.0
    %559 = vmatpush1.msra.mxu0 0.0
    %560 = vmatprep.subr.mxu0 0.0
    %561 = vmatpush1.msra.mxu0 0.0
    %562 = vmatprep.subr.mxu0 0.0
    %563 = vmatpush1.msra.mxu0 0.0
    %564 = vmatprep.subr.mxu0 0.0
    %565 = vmatpush1.msra.mxu0 0.0
    %566 = vmatprep.subr.mxu0 0.0
    %567 = vmatpush1.msra.mxu0 0.0
    %568 = vmatprep.subr.mxu0 0.0
    %569 = vmatpush1.msra.mxu0 0.0
    %570 = vmatprep.subr.mxu0 0.0
    %571 = vmatpush1.msra.mxu0 0.0
    %572 = vmatprep.subr.mxu0 0.0
    %573 = vmatpush1.msra.mxu0 0.0
    %574 = vmatprep.subr.mxu0 0.0
    %575 = vmatpush1.msra.mxu0 0.0
    %576 = vmatprep.subr.mxu0 0.0
    %577 = vmatpush1.msra.mxu0 0.0
    %578 = vmatprep.subr.mxu0 0.0
    %579 = vmatpush1.msra.mxu0 0.0
    %580 = vmatprep.subr.mxu0 0.0
    %581 = vmatpush1.msra.mxu0 0.0
    %582 = vmatprep.subr.mxu0 0.0
    %583 = vmatpush1.msra.mxu0 0.0
    %584 = vmatprep.mubr.f32.mxu0 0.0
    %585 = vmatmul.mubr.f32.gmra.mrb[0].mxu0 %v515
    %v586 = vpop.f32.mrb[0].mxu0
    %v587 = vadd.f32 0.0, %v586
    %v588 = vpop.f32.mrb[0].mxu0
    %589 = vmatprep.mubr.f32.mxu0 0.0
    %590 = vmatmul.mubr.f32.gmra.mrb[0].mxu0 %v518
    %v591 = vpop.f32.mrb[0].mxu0
    %v592 = vadd.f32 0.0, %v591
    %v593 = vpop.f32.mrb[0].mxu0
    %594 = vdwg.mxu0
    %v596 = vsel %vm311, %v587, 0
    %v599 = vsel %vm311, %v592, 0
    %601 = vmatprep.subr.mxu0 0.0
    %602 = vmatpush1.msra.mxu0 %v53
    %603 = vmatprep.subr.mxu0 0.0
    %604 = vmatpush1.msra.mxu0 %v54
    %605 = vmatprep.subr.mxu0 0.0
    %606 = vmatpush1.msra.mxu0 0.0
    %607 = vmatprep.subr.mxu0 0.0
    %608 = vmatpush1.msra.mxu0 0.0
    %609 = vmatprep.subr.mxu0 0.0
    %610 = vmatpush1.msra.mxu0 0.0
    %611 = vmatprep.subr.mxu0 0.0
    %612 = vmatpush1.msra.mxu0 0.0
    %613 = vmatprep.subr.mxu0 0.0
    %614 = vmatpush1.msra.mxu0 0.0
    %615 = vmatprep.subr.mxu0 0.0
    %616 = vmatpush1.msra.mxu0 0.0
    %617 = vmatprep.subr.mxu0 0.0
    %618 = vmatpush1.msra.mxu0 0.0
    %619 = vmatprep.subr.mxu0 0.0
    %620 = vmatpush1.msra.mxu0 0.0
    %621 = vmatprep.subr.mxu0 0.0
    %622 = vmatpush1.msra.mxu0 0.0
    %623 = vmatprep.subr.mxu0 0.0
    %624 = vmatpush1.msra.mxu0 0.0
    %625 = vmatprep.subr.mxu0 0.0
    %626 = vmatpush1.msra.mxu0 0.0
    %627 = vmatprep.subr.mxu0 0.0
    %628 = vmatpush1.msra.mxu0 0.0
    %629 = vmatprep.subr.mxu0 0.0
    %630 = vmatpush1.msra.mxu0 0.0
    %631 = vmatprep.subr.mxu0 0.0
    %632 = vmatpush1.msra.mxu0 0.0
    %633 = vmatprep.subr.mxu0 0.0
    %634 = vmatpush1.msra.mxu0 0.0
    %635 = vmatprep.subr.mxu0 0.0
    %636 = vmatpush1.msra.mxu0 0.0
    %637 = vmatprep.subr.mxu0 0.0
    %638 = vmatpush1.msra.mxu0 0.0
    %639 = vmatprep.subr.mxu0 0.0
    %640 = vmatpush1.msra.mxu0 0.0
    %641 = vmatprep.subr.mxu0 0.0
    %642 = vmatpush1.msra.mxu0 0.0
    %643 = vmatprep.subr.mxu0 0.0
    %644 = vmatpush1.msra.mxu0 0.0
    %645 = vmatprep.subr.mxu0 0.0
    %646 = vmatpush1.msra.mxu0 0.0
    %647 = vmatprep.subr.mxu0 0.0
    %648 = vmatpush1.msra.mxu0 0.0
    %649 = vmatprep.subr.mxu0 0.0
    %650 = vmatpush1.msra.mxu0 0.0
    %651 = vmatprep.subr.mxu0 0.0
    %652 = vmatpush1.msra.mxu0 0.0
    %653 = vmatprep.subr.mxu0 0.0
    %654 = vmatpush1.msra.mxu0 0.0
    %655 = vmatprep.subr.mxu0 0.0
    %656 = vmatpush1.msra.mxu0 0.0
    %657 = vmatprep.subr.mxu0 0.0
    %658 = vmatpush1.msra.mxu0 0.0
    %659 = vmatprep.subr.mxu0 0.0
    %660 = vmatpush1.msra.mxu0 0.0
    %661 = vmatprep.subr.mxu0 0.0
    %662 = vmatpush1.msra.mxu0 0.0
    %663 = vmatprep.subr.mxu0 0.0
    %664 = vmatpush1.msra.mxu0 0.0
    %665 = vmatprep.mubr.f32.mxu0 0.0
    %666 = vmatmul.mubr.f32.gmra.mrb[0].mxu0 %v596
    %v667 = vpop.f32.mrb[0].mxu0
    %v668 = vadd.f32 0.0, %v667
    %v669 = vpop.f32.mrb[0].mxu0
    %670 = vmatprep.mubr.f32.mxu0 0.0
    %671 = vmatmul.mubr.f32.gmra.mrb[0].mxu0 %v599
    %v672 = vpop.f32.mrb[0].mxu0
    %v673 = vadd.f32 0.0, %v672
    %v674 = vpop.f32.mrb[0].mxu0
    %675 = vdwg.mxu0
    %v677 = vsel %vm311, %v668, 0
    %v680 = vsel %vm311, %v673, 0
    %682 = vmatprep.subr.mxu0 0.0
    %683 = vmatpush1.msra.mxu0 %v53
    %684 = vmatprep.subr.mxu0 0.0
    %685 = vmatpush1.msra.mxu0 %v54
    %686 = vmatprep.subr.mxu0 0.0
    %687 = vmatpush1.msra.mxu0 0.0
    %688 = vmatprep.subr.mxu0 0.0
    %689 = vmatpush1.msra.mxu0 0.0
    %690 = vmatprep.subr.mxu0 0.0
    %691 = vmatpush1.msra.mxu0 0.0
    %692 = vmatprep.subr.mxu0 0.0
    %693 = vmatpush1.msra.mxu0 0.0
    %694 = vmatprep.subr.mxu0 0.0
    %695 = vmatpush1.msra.mxu0 0.0
    %696 = vmatprep.subr.mxu0 0.0
    %697 = vmatpush1.msra.mxu0 0.0
    %698 = vmatprep.subr.mxu0 0.0
    %699 = vmatpush1.msra.mxu0 0.0
    %700 = vmatprep.subr.mxu0 0.0
    %701 = vmatpush1.msra.mxu0 0.0
    %702 = vmatprep.subr.mxu0 0.0
    %703 = vmatpush1.msra.mxu0 0.0
    %704 = vmatprep.subr.mxu0 0.0
    %705 = vmatpush1.msra.mxu0 0.0
    %706 = vmatprep.subr.mxu0 0.0
    %707 = vmatpush1.msra.mxu0 0.0
    %708 = vmatprep.subr.mxu0 0.0
    %709 = vmatpush1.msra.mxu0 0.0
    %710 = vmatprep.subr.mxu0 0.0
    %711 = vmatpush1.msra.mxu0 0.0
    %712 = vmatprep.subr.mxu0 0.0
    %713 = vmatpush1.msra.mxu0 0.0
    %714 = vmatprep.subr.mxu0 0.0
    %715 = vmatpush1.msra.mxu0 0.0
    %716 = vmatprep.subr.mxu0 0.0
    %717 = vmatpush1.msra.mxu0 0.0
    %718 = vmatprep.subr.mxu0 0.0
    %719 = vmatpush1.msra.mxu0 0.0
    %720 = vmatprep.subr.mxu0 0.0
    %721 = vmatpush1.msra.mxu0 0.0
    %722 = vmatprep.subr.mxu0 0.0
    %723 = vmatpush1.msra.mxu0 0.0
    %724 = vmatprep.subr.mxu0 0.0
    %725 = vmatpush1.msra.mxu0 0.0
    %726 = vmatprep.subr.mxu0 0.0
    %727 = vmatpush1.msra.mxu0 0.0
    %728 = vmatprep.subr.mxu0 0.0
    %729 = vmatpush1.msra.mxu0 0.0
    %730 = vmatprep.subr.mxu0 0.0
    %731 = vmatpush1.msra.mxu0 0.0
    %732 = vmatprep.subr.mxu0 0.0
    %733 = vmatpush1.msra.mxu0 0.0
    %734 = vmatprep.subr.mxu0 0.0
    %735 = vmatpush1.msra.mxu0 0.0
    %736 = vmatprep.subr.mxu0 0.0
    %737 = vmatpush1.msra.mxu0 0.0
    %738 = vmatprep.subr.mxu0 0.0
    %739 = vmatpush1.msra.mxu0 0.0
    %740 = vmatprep.subr.mxu0 0.0
    %741 = vmatpush1.msra.mxu0 0.0
    %742 = vmatprep.subr.mxu0 0.0
    %743 = vmatpush1.msra.mxu0 0.0
    %744 = vmatprep.subr.mxu0 0.0
    %745 = vmatpush1.msra.mxu0 0.0
    %746 = vmatprep.mubr.f32.mxu0 0.0
    %747 = vmatmul.mubr.f32.gmra.mrb[0].mxu0 %v677
    %v748 = vpop.f32.mrb[0].mxu0
    %v749 = vadd.f32 0.0, %v748
    %v750 = vpop.f32.mrb[0].mxu0
    %751 = vmatprep.mubr.f32.mxu0 0.0
    %752 = vmatmul.mubr.f32.gmra.mrb[0].mxu0 %v680
    %v753 = vpop.f32.mrb[0].mxu0
    %v754 = vadd.f32 0.0, %v753
    %v755 = vpop.f32.mrb[0].mxu0
    %756 = vdwg.mxu0
    %v757 = vlaneseq
    %v758 = vshrl.u32 %v757, 7
    %v759 = vadd.s32 %v758, 8
    %v760 = vlaneseq
    %v761 = vand.u32 %v760, 127
    %vm762 = vcmp.eq.s32.totalorder %v758, %v761
    %vm763 = vcmp.eq.s32.totalorder %v759, %v761
    %v764 = vsel %vm762, 1.0, 0.0
    %v765 = vsel %vm763, 1.0, 0.0
    %766 = vrot.lane.b32.xlu0 %v587, 16
    %v767 = vpop.permute.xlu0 %766
    %768 = vrot.lane.b32.xlu0 %v592, 16
    %v769 = vpop.permute.xlu0 %768
    %772 = vrot.lane.b32.xlu0 %v668, 32
    %v773 = vpop.permute.xlu0 %772
    %774 = vrot.lane.b32.xlu0 %v673, 32
    %v775 = vpop.permute.xlu0 %774
    %780 = vrot.lane.b32.xlu0 %v749, 48
    %v781 = vpop.permute.xlu0 %780
    %782 = vrot.lane.b32.xlu0 %v754, 48
    %v783 = vpop.permute.xlu0 %782
    %v786 = vsel %vm311, %v53, %v767
    %v787 = vsel %vm311, %v54, %v769
    %v788 = vsel %vm201, %v786, %v773
    %v789 = vsel %vm201, %v787, %v775
    %vm790 = vcmask 392192
    %v791 = vsel %vm790, %v788, %v781
    %v792 = vsel %vm790, %v789, %v783
    %793 = vrot.lane.b32.xlu0 %v53, 16
    %v794 = vpop.permute.xlu0 %793
    %795 = vrot.lane.b32.xlu0 %v54, 16
    %v796 = vpop.permute.xlu0 %795
    %799 = vrot.lane.b32.xlu0 %v587, 32
    %v800 = vpop.permute.xlu0 %799
    %801 = vrot.lane.b32.xlu0 %v592, 32
    %v802 = vpop.permute.xlu0 %801
    %805 = vrot.lane.b32.xlu0 %v668, 48
    %v806 = vpop.permute.xlu0 %805
    %807 = vrot.lane.b32.xlu0 %v673, 48
    %v808 = vpop.permute.xlu0 %807
    %v811 = vsel %vm311, %v764, %v794
    %v812 = vsel %vm311, %v765, %v796
    %v813 = vsel %vm201, %v811, %v800
    %v814 = vsel %vm201, %v812, %v802
    %v815 = vsel %vm790, %v813, %v806
    %v816 = vsel %vm790, %v814, %v808
    %819 = vrot.lane.b32.xlu0 %v764, 16
    %v820 = vpop.permute.xlu0 %819
    %821 = vrot.lane.b32.xlu0 %v765, 16
    %v822 = vpop.permute.xlu0 %821
    %825 = vrot.lane.b32.xlu0 %v53, 32
    %v826 = vpop.permute.xlu0 %825
    %827 = vrot.lane.b32.xlu0 %v54, 32
    %v828 = vpop.permute.xlu0 %827
    %831 = vrot.lane.b32.xlu0 %v587, 48
    %v832 = vpop.permute.xlu0 %831
    %833 = vrot.lane.b32.xlu0 %v592, 48
    %v834 = vpop.permute.xlu0 %833
    %v837 = vsel %vm311, 0.0, %v820
    %v838 = vsel %vm311, 0.0, %v822
    %v839 = vsel %vm201, %v837, %v826
    %v840 = vsel %vm201, %v838, %v828
    %v841 = vsel %vm790, %v839, %v832
    %v842 = vsel %vm790, %v840, %v834
    %843 = vrot.lane.b32.xlu0 %v764, 32
    %v844 = vpop.permute.xlu0 %843
    %845 = vrot.lane.b32.xlu0 %v765, 32
    %v846 = vpop.permute.xlu0 %845
    %849 = vrot.lane.b32.xlu0 %v53, 48
    %v850 = vpop.permute.xlu0 %849
    %851 = vrot.lane.b32.xlu0 %v54, 48
    %v852 = vpop.permute.xlu0 %851
    %v855 = vsel %vm201, 0.0, %v844
    %v856 = vsel %vm201, 0.0, %v846
    %v857 = vsel %vm790, %v855, %v850
    %v858 = vsel %vm790, %v856, %v852
    %859 = vrot.lane.b32.xlu0 %v764, 48
    %v860 = vpop.permute.xlu0 %859
    %861 = vrot.lane.b32.xlu0 %v765, 48
    %v862 = vpop.permute.xlu0 %861
    %v865 = vsel %vm790, 0.0, %v860
    %v866 = vsel %vm790, 0.0, %v862
    %v867 = vsel %vm311, %v55, 0.0
    %v868 = vsel %vm201, %v867, 0.0
    %v869 = vsel %vm790, %v868, 0.0
    %871 = vrot.lane.b32.xlu0 %v55, 16
    %v872 = vpop.permute.xlu0 %871
    %v874 = vsel %vm311, 0.0, %v872
    %v875 = vsel %vm201, %v874, 0.0
    %v876 = vsel %vm790, %v875, 0.0
    %877 = vrot.lane.b32.xlu0 %v55, 32
    %v878 = vpop.permute.xlu0 %877
    %v880 = vsel %vm201, 0.0, %v878
    %v881 = vsel %vm790, %v880, 0.0
    %882 = vrot.lane.b32.xlu0 %v55, 48
    %v883 = vpop.permute.xlu0 %882
    %v885 = vsel %vm790, 0.0, %v883
    %v887 = vrot.slane %v876, 6
    %v890 = vrot.slane %v881, 4
    %v893 = vrot.slane %v885, 2
    %vm895 = vcmask 1041408
    %v896 = vsel %vm895, %v869, %v887
    %v897 = vsel %vm70, %v896, %v890
    %vm898 = vcmask 1045504
    %v899 = vsel %vm898, %v897, %v893
    %vm900 = vcmask 64512
    %v902 = vsel %vm900, %v77, 0
    %904 = vmatprep.subr.mxu0 0.0
    %905 = vmatpush1.msra.mxu0 %v899
    %906 = vmatprep.subr.mxu0 0.0
    %907 = vmatpush1.msra.mxu0 0.0
    %908 = vmatprep.subr.mxu0 0.0
    %909 = vmatpush1.msra.mxu0 0.0
    %910 = vmatprep.subr.mxu0 0.0
    %911 = vmatpush1.msra.mxu0 0.0
    %912 = vmatprep.subr.mxu0 0.0
    %913 = vmatpush1.msra.mxu0 0.0
    %914 = vmatprep.subr.mxu0 0.0
    %915 = vmatpush1.msra.mxu0 0.0
    %916 = vmatprep.subr.mxu0 0.0
    %917 = vmatpush1.msra.mxu0 0.0
    %918 = vmatprep.subr.mxu0 0.0
    %919 = vmatpush1.msra.mxu0 0.0
    %920 = vmatprep.subr.mxu0 0.0
    %921 = vmatpush1.msra.mxu0 0.0
    %922 = vmatprep.subr.mxu0 0.0
    %923 = vmatpush1.msra.mxu0 0.0
    %924 = vmatprep.subr.mxu0 0.0
    %925 = vmatpush1.msra.mxu0 0.0
    %926 = vmatprep.subr.mxu0 0.0
    %927 = vmatpush1.msra.mxu0 0.0
    %928 = vmatprep.subr.mxu0 0.0
    %929 = vmatpush1.msra.mxu0 0.0
    %930 = vmatprep.subr.mxu0 0.0
    %931 = vmatpush1.msra.mxu0 0.0
    %932 = vmatprep.subr.mxu0 0.0
    %933 = vmatpush1.msra.mxu0 0.0
    %934 = vmatprep.subr.mxu0 0.0
    %935 = vmatpush1.msra.mxu0 0.0
    %936 = vmatprep.subr.mxu0 0.0
    %937 = vmatpush1.msra.mxu0 0.0
    %938 = vmatprep.subr.mxu0 0.0
    %939 = vmatpush1.msra.mxu0 0.0
    %940 = vmatprep.subr.mxu0 0.0
    %941 = vmatpush1.msra.mxu0 0.0
    %942 = vmatprep.subr.mxu0 0.0
    %943 = vmatpush1.msra.mxu0 0.0
    %944 = vmatprep.subr.mxu0 0.0
    %945 = vmatpush1.msra.mxu0 0.0
    %946 = vmatprep.subr.mxu0 0.0
    %947 = vmatpush1.msra.mxu0 0.0
    %948 = vmatprep.subr.mxu0 0.0
    %949 = vmatpush1.msra.mxu0 0.0
    %950 = vmatprep.subr.mxu0 0.0
    %951 = vmatpush1.msra.mxu0 0.0
    %952 = vmatprep.subr.mxu0 0.0
    %953 = vmatpush1.msra.mxu0 0.0
    %954 = vmatprep.subr.mxu0 0.0
    %955 = vmatpush1.msra.mxu0 0.0
    %956 = vmatprep.subr.mxu0 0.0
    %957 = vmatpush1.msra.mxu0 0.0
    %958 = vmatprep.subr.mxu0 0.0
    %959 = vmatpush1.msra.mxu0 0.0
    %960 = vmatprep.subr.mxu0 0.0
    %961 = vmatpush1.msra.mxu0 0.0
    %962 = vmatprep.subr.mxu0 0.0
    %963 = vmatpush1.msra.mxu0 0.0
    %964 = vmatprep.subr.mxu0 0.0
    %965 = vmatpush1.msra.mxu0 0.0
    %966 = vmatprep.subr.mxu0 0.0
    %967 = vmatpush1.msra.mxu0 0.0
    %968 = vmatprep.mubr.f32.mxu0 0.0
    %969 = vmatmul.mubr.f32.gmra.mrb[0].mxu0 %v902
    %v970 = vpop.f32.mrb[0].mxu0
    %v971 = vadd.f32 0.0, %v970
    %v972 = vpop.f32.mrb[0].mxu0
    %973 = vdwg.mxu0
    %vm974 = vcmask 523264
    %v976 = vsel %vm974, %v971, 0
    %978 = vmatprep.subr.mxu0 0.0
    %979 = vmatpush1.msra.mxu0 %v815
    %980 = vmatprep.subr.mxu0 0.0
    %981 = vmatpush1.msra.mxu0 %v816
    %982 = vmatprep.subr.mxu0 0.0
    %983 = vmatpush1.msra.mxu0 %v841
    %984 = vmatprep.subr.mxu0 0.0
    %985 = vmatpush1.msra.mxu0 %v842
    %986 = vmatprep.subr.mxu0 0.0
    %987 = vmatpush1.msra.mxu0 %v857
    %988 = vmatprep.subr.mxu0 0.0
    %989 = vmatpush1.msra.mxu0 %v858
    %990 = vmatprep.subr.mxu0 0.0
    %991 = vmatpush1.msra.mxu0 %v865
    %992 = vmatprep.subr.mxu0 0.0
    %993 = vmatpush1.msra.mxu0 %v866
    %994 = vmatprep.subr.mxu0 0.0
    %995 = vmatpush1.msra.mxu0 0.0
    %996 = vmatprep.subr.mxu0 0.0
    %997 = vmatpush1.msra.mxu0 0.0
    %998 = vmatprep.subr.mxu0 0.0
    %999 = vmatpush1.msra.mxu0 0.0
    %1000 = vmatprep.subr.mxu0 0.0
    %1001 = vmatpush1.msra.mxu0 0.0
    %1002 = vmatprep.subr.mxu0 0.0
    %1003 = vmatpush1.msra.mxu0 0.0
    %1004 = vmatprep.subr.mxu0 0.0
    %1005 = vmatpush1.msra.mxu0 0.0
    %1006 = vmatprep.subr.mxu0 0.0
    %1007 = vmatpush1.msra.mxu0 0.0
    %1008 = vmatprep.subr.mxu0 0.0
    %1009 = vmatpush1.msra.mxu0 0.0
    %1010 = vmatprep.subr.mxu0 0.0
    %1011 = vmatpush1.msra.mxu0 0.0
    %1012 = vmatprep.subr.mxu0 0.0
    %1013 = vmatpush1.msra.mxu0 0.0
    %1014 = vmatprep.subr.mxu0 0.0
    %1015 = vmatpush1.msra.mxu0 0.0
    %1016 = vmatprep.subr.mxu0 0.0
    %1017 = vmatpush1.msra.mxu0 0.0
    %1018 = vmatprep.subr.mxu0 0.0
    %1019 = vmatpush1.msra.mxu0 0.0
    %1020 = vmatprep.subr.mxu0 0.0
    %1021 = vmatpush1.msra.mxu0 0.0
    %1022 = vmatprep.subr.mxu0 0.0
    %1023 = vmatpush1.msra.mxu0 0.0
    %1024 = vmatprep.subr.mxu0 0.0
    %1025 = vmatpush1.msra.mxu0 0.0
    %1026 = vmatprep.subr.mxu0 0.0
    %1027 = vmatpush1.msra.mxu0 0.0
    %1028 = vmatprep.subr.mxu0 0.0
    %1029 = vmatpush1.msra.mxu0 0.0
    %1030 = vmatprep.subr.mxu0 0.0
    %1031 = vmatpush1.msra.mxu0 0.0
    %1032 = vmatprep.subr.mxu0 0.0
    %1033 = vmatpush1.msra.mxu0 0.0
    %1034 = vmatprep.subr.mxu0 0.0
    %1035 = vmatpush1.msra.mxu0 0.0
    %1036 = vmatprep.subr.mxu0 0.0
    %1037 = vmatpush1.msra.mxu0 0.0
    %1038 = vmatprep.subr.mxu0 0.0
    %1039 = vmatpush1.msra.mxu0 0.0
    %1040 = vmatprep.subr.mxu0 0.0
    %1041 = vmatpush1.msra.mxu0 0.0
    %1042 = vmatprep.mubr.f32.mxu0 0.0
    %1043 = vmatmul.mubr.f32.gmra.mrb[0].mxu0 %v976
    %v1044 = vpop.f32.mrb[0].mxu0
    %v1045 = vadd.f32 0.0, %v1044
    %v1046 = vpop.f32.mrb[0].mxu0
    %1047 = vdwg.mxu0
    %v1049 = vsel %vm311, %v284, 0
    %1051 = vmatprep.subr.mxu0 0.0
    %1052 = vmatpush1.msra.mxu0 %v791
    %1053 = vmatprep.subr.mxu0 0.0
    %1054 = vmatpush1.msra.mxu0 %v792
    %1055 = vmatprep.subr.mxu0 0.0
    %1056 = vmatpush1.msra.mxu0 0.0
    %1057 = vmatprep.subr.mxu0 0.0
    %1058 = vmatpush1.msra.mxu0 0.0
    %1059 = vmatprep.subr.mxu0 0.0
    %1060 = vmatpush1.msra.mxu0 0.0
    %1061 = vmatprep.subr.mxu0 0.0
    %1062 = vmatpush1.msra.mxu0 0.0
    %1063 = vmatprep.subr.mxu0 0.0
    %1064 = vmatpush1.msra.mxu0 0.0
    %1065 = vmatprep.subr.mxu0 0.0
    %1066 = vmatpush1.msra.mxu0 0.0
    %1067 = vmatprep.subr.mxu0 0.0
    %1068 = vmatpush1.msra.mxu0 0.0
    %1069 = vmatprep.subr.mxu0 0.0
    %1070 = vmatpush1.msra.mxu0 0.0
    %1071 = vmatprep.subr.mxu0 0.0
    %1072 = vmatpush1.msra.mxu0 0.0
    %1073 = vmatprep.subr.mxu0 0.0
    %1074 = vmatpush1.msra.mxu0 0.0
    %1075 = vmatprep.subr.mxu0 0.0
    %1076 = vmatpush1.msra.mxu0 0.0
    %1077 = vmatprep.subr.mxu0 0.0
    %1078 = vmatpush1.msra.mxu0 0.0
    %1079 = vmatprep.subr.mxu0 0.0
    %1080 = vmatpush1.msra.mxu0 0.0
    %1081 = vmatprep.subr.mxu0 0.0
    %1082 = vmatpush1.msra.mxu0 0.0
    %1083 = vmatprep.subr.mxu0 0.0
    %1084 = vmatpush1.msra.mxu0 0.0
    %1085 = vmatprep.subr.mxu0 0.0
    %1086 = vmatpush1.msra.mxu0 0.0
    %1087 = vmatprep.subr.mxu0 0.0
    %1088 = vmatpush1.msra.mxu0 0.0
    %1089 = vmatprep.subr.mxu0 0.0
    %1090 = vmatpush1.msra.mxu0 0.0
    %1091 = vmatprep.subr.mxu0 0.0
    %1092 = vmatpush1.msra.mxu0 0.0
    %1093 = vmatprep.subr.mxu0 0.0
    %1094 = vmatpush1.msra.mxu0 0.0
    %1095 = vmatprep.subr.mxu0 0.0
    %1096 = vmatpush1.msra.mxu0 0.0
    %1097 = vmatprep.subr.mxu0 0.0
    %1098 = vmatpush1.msra.mxu0 0.0
    %1099 = vmatprep.subr.mxu0 0.0
    %1100 = vmatpush1.msra.mxu0 0.0
    %1101 = vmatprep.subr.mxu0 0.0
    %1102 = vmatpush1.msra.mxu0 0.0
    %1103 = vmatprep.subr.mxu0 0.0
    %1104 = vmatpush1.msra.mxu0 0.0
    %1105 = vmatprep.subr.mxu0 0.0
    %1106 = vmatpush1.msra.mxu0 0.0
    %1107 = vmatprep.subr.mxu0 0.0
    %1108 = vmatpush1.msra.mxu0 0.0
    %1109 = vmatprep.subr.mxu0 0.0
    %1110 = vmatpush1.msra.mxu0 0.0
    %1111 = vmatprep.subr.mxu0 0.0
    %1112 = vmatpush1.msra.mxu0 0.0
    %1113 = vmatprep.subr.mxu0 0.0
    %1114 = vmatpush1.msra.mxu0 0.0
    %1115 = vmatprep.mubr.f32.mxu0 0.0
    %1116 = vmatmul.mubr.f32.gmra.mrb[0].mxu0 %v1049
    %v1117 = vpop.f32.mrb[0].mxu0
    %v1118 = vadd.f32 %v1045, %v1117
    %v1119 = vpop.f32.mrb[0].mxu0
    %1120 = vdwg.mxu0
    %1122 = vrot.lane.b32.xlu0 %v1118, 112
    %v1123 = vpop.permute.xlu0 %1122
    %1125 = vrot.lane.b32.xlu0 %v1118, 96
    %v1126 = vpop.permute.xlu0 %1125
    %1128 = vrot.lane.b32.xlu0 %v1118, 80
    %v1129 = vpop.permute.xlu0 %1128
    %v1131 = vsel %vm311, %v1118, 0
    %v1133 = vsel %vm311, %v1123, 0
    %v1135 = vsel %vm311, %v1126, 0
    %v1137 = vsel %vm311, %v1129, 0
    %1139 = vmatprep.subr.mxu0 0.0
    %1140 = vmatpush1.msra.mxu0 %v45
    %1141 = vmatprep.subr.mxu0 0.0
    %1142 = vmatpush1.msra.mxu0 %v46
    %1143 = vmatprep.subr.mxu0 0.0
    %1144 = vmatpush1.msra.mxu0 0.0
    %1145 = vmatprep.subr.mxu0 0.0
    %1146 = vmatpush1.msra.mxu0 0.0
    %1147 = vmatprep.subr.mxu0 0.0
    %1148 = vmatpush1.msra.mxu0 0.0
    %1149 = vmatprep.subr.mxu0 0.0
    %1150 = vmatpush1.msra.mxu0 0.0
    %1151 = vmatprep.subr.mxu0 0.0
    %1152 = vmatpush1.msra.mxu0 0.0
    %1153 = vmatprep.subr.mxu0 0.0
    %1154 = vmatpush1.msra.mxu0 0.0
    %1155 = vmatprep.subr.mxu0 0.0
    %1156 = vmatpush1.msra.mxu0 0.0
    %1157 = vmatprep.subr.mxu0 0.0
    %1158 = vmatpush1.msra.mxu0 0.0
    %1159 = vmatprep.subr.mxu0 0.0
    %1160 = vmatpush1.msra.mxu0 0.0
    %1161 = vmatprep.subr.mxu0 0.0
    %1162 = vmatpush1.msra.mxu0 0.0
    %1163 = vmatprep.subr.mxu0 0.0
    %1164 = vmatpush1.msra.mxu0 0.0
    %1165 = vmatprep.subr.mxu0 0.0
    %1166 = vmatpush1.msra.mxu0 0.0
    %1167 = vmatprep.subr.mxu0 0.0
    %1168 = vmatpush1.msra.mxu0 0.0
    %1169 = vmatprep.subr.mxu0 0.0
    %1170 = vmatpush1.msra.mxu0 0.0
    %1171 = vmatprep.subr.mxu0 0.0
    %1172 = vmatpush1.msra.mxu0 0.0
    %1173 = vmatprep.subr.mxu0 0.0
    %1174 = vmatpush1.msra.mxu0 0.0
    %1175 = vmatprep.subr.mxu0 0.0
    %1176 = vmatpush1.msra.mxu0 0.0
    %1177 = vmatprep.subr.mxu0 0.0
    %1178 = vmatpush1.msra.mxu0 0.0
    %1179 = vmatprep.subr.mxu0 0.0
    %1180 = vmatpush1.msra.mxu0 0.0
    %1181 = vmatprep.subr.mxu0 0.0
    %1182 = vmatpush1.msra.mxu0 0.0
    %1183 = vmatprep.subr.mxu0 0.0
    %1184 = vmatpush1.msra.mxu0 0.0
    %1185 = vmatprep.subr.mxu0 0.0
    %1186 = vmatpush1.msra.mxu0 0.0
    %1187 = vmatprep.subr.mxu0 0.0
    %1188 = vmatpush1.msra.mxu0 0.0
    %1189 = vmatprep.subr.mxu0 0.0
    %1190 = vmatpush1.msra.mxu0 0.0
    %1191 = vmatprep.subr.mxu0 0.0
    %1192 = vmatpush1.msra.mxu0 0.0
    %1193 = vmatprep.subr.mxu0 0.0
    %1194 = vmatpush1.msra.mxu0 0.0
    %1195 = vmatprep.subr.mxu0 0.0
    %1196 = vmatpush1.msra.mxu0 0.0
    %1197 = vmatprep.subr.mxu0 0.0
    %1198 = vmatpush1.msra.mxu0 0.0
    %1199 = vmatprep.subr.mxu0 0.0
    %1200 = vmatpush1.msra.mxu0 0.0
    %1201 = vmatprep.subr.mxu0 0.0
    %1202 = vmatpush1.msra.mxu0 0.0
    %1203 = vmatprep.mubr.f32.mxu0 0.0
    %1204 = vmatmul.mubr.f32.gmra.mrb[0].mxu0 %v1131
    %v1205 = vpop.f32.mrb[0].mxu0
    %v1206 = vadd.f32 %v310, %v1205
    %v1207 = vpop.f32.mrb[0].mxu0
    %1208 = vmatprep.mubr.f32.mxu0 0.0
    %1209 = vmatmul.mubr.f32.gmra.mrb[0].mxu0 %v1133
    %v1210 = vpop.f32.mrb[0].mxu0
    %v1211 = vadd.f32 %v310, %v1210
    %v1212 = vpop.f32.mrb[0].mxu0
    %1213 = vmatprep.mubr.f32.mxu0 0.0
    %1214 = vmatmul.mubr.f32.gmra.mrb[0].mxu0 %v1135
    %v1215 = vpop.f32.mrb[0].mxu0
    %v1216 = vadd.f32 %v310, %v1215
    %v1217 = vpop.f32.mrb[0].mxu0
    %1218 = vmatprep.mubr.f32.mxu0 0.0
    %1219 = vmatmul.mubr.f32.gmra.mrb[0].mxu0 %v1137
    %v1220 = vpop.f32.mrb[0].mxu0
    %v1221 = vadd.f32 %v310, %v1220
    %v1222 = vpop.f32.mrb[0].mxu0
    %1223 = vdwg.mxu0
    %v1224 = vmax.f32 %v1206, 0.0
    %v1225 = vmax.f32 %v1211, 0.0
    %v1226 = vmax.f32 %v1216, 0.0
    %v1227 = vmax.f32 %v1221, 0.0
    %v1229 = vsel %vm201, %v1224, 0
    %v1232 = vsel %vm201, %v1225, 0
    %v1235 = vsel %vm201, %v1226, 0
    %v1238 = vsel %vm201, %v1227, 0
    %1240 = vmatprep.subr.mxu0 0.0
    %1241 = vmatpush1.msra.mxu0 %v48
    %1242 = vmatprep.subr.mxu0 0.0
    %1243 = vmatpush1.msra.mxu0 %v49
    %1244 = vmatprep.subr.mxu0 0.0
    %1245 = vmatpush1.msra.mxu0 %v50
    %1246 = vmatprep.subr.mxu0 0.0
    %1247 = vmatpush1.msra.mxu0 %v51
    %1248 = vmatprep.subr.mxu0 0.0
    %1249 = vmatpush1.msra.mxu0 0.0
    %1250 = vmatprep.subr.mxu0 0.0
    %1251 = vmatpush1.msra.mxu0 0.0
    %1252 = vmatprep.subr.mxu0 0.0
    %1253 = vmatpush1.msra.mxu0 0.0
    %1254 = vmatprep.subr.mxu0 0.0
    %1255 = vmatpush1.msra.mxu0 0.0
    %1256 = vmatprep.subr.mxu0 0.0
    %1257 = vmatpush1.msra.mxu0 0.0
    %1258 = vmatprep.subr.mxu0 0.0
    %1259 = vmatpush1.msra.mxu0 0.0
    %1260 = vmatprep.subr.mxu0 0.0
    %1261 = vmatpush1.msra.mxu0 0.0
    %1262 = vmatprep.subr.mxu0 0.0
    %1263 = vmatpush1.msra.mxu0 0.0
    %1264 = vmatprep.subr.mxu0 0.0
    %1265 = vmatpush1.msra.mxu0 0.0
    %1266 = vmatprep.subr.mxu0 0.0
    %1267 = vmatpush1.msra.mxu0 0.0
    %1268 = vmatprep.subr.mxu0 0.0
    %1269 = vmatpush1.msra.mxu0 0.0
    %1270 = vmatprep.subr.mxu0 0.0
    %1271 = vmatpush1.msra.mxu0 0.0
    %1272 = vmatprep.subr.mxu0 0.0
    %1273 = vmatpush1.msra.mxu0 0.0
    %1274 = vmatprep.subr.mxu0 0.0
    %1275 = vmatpush1.msra.mxu0 0.0
    %1276 = vmatprep.subr.mxu0 0.0
    %1277 = vmatpush1.msra.mxu0 0.0
    %1278 = vmatprep.subr.mxu0 0.0
    %1279 = vmatpush1.msra.mxu0 0.0
    %1280 = vmatprep.subr.mxu0 0.0
    %1281 = vmatpush1.msra.mxu0 0.0
    %1282 = vmatprep.subr.mxu0 0.0
    %1283 = vmatpush1.msra.mxu0 0.0
    %1284 = vmatprep.subr.mxu0 0.0
    %1285 = vmatpush1.msra.mxu0 0.0
    %1286 = vmatprep.subr.mxu0 0.0
    %1287 = vmatpush1.msra.mxu0 0.0
    %1288 = vmatprep.subr.mxu0 0.0
    %1289 = vmatpush1.msra.mxu0 0.0
    %1290 = vmatprep.subr.mxu0 0.0
    %1291 = vmatpush1.msra.mxu0 0.0
    %1292 = vmatprep.subr.mxu0 0.0
    %1293 = vmatpush1.msra.mxu0 0.0
    %1294 = vmatprep.subr.mxu0 0.0
    %1295 = vmatpush1.msra.mxu0 0.0
    %1296 = vmatprep.subr.mxu0 0.0
    %1297 = vmatpush1.msra.mxu0 0.0
    %1298 = vmatprep.subr.mxu0 0.0
    %1299 = vmatpush1.msra.mxu0 0.0
    %1300 = vmatprep.subr.mxu0 0.0
    %1301 = vmatpush1.msra.mxu0 0.0
    %1302 = vmatprep.subr.mxu0 0.0
    %1303 = vmatpush1.msra.mxu0 0.0
    %1304 = vmatprep.mubr.f32.mxu0 0.0
    %1305 = vmatmul.mubr.f32.gmra.mrb[0].mxu0 %v1229
    %v1306 = vpop.f32.mrb[0].mxu0
    %v1307 = vadd.f32 %v416, %v1306
    %v1308 = vpop.f32.mrb[0].mxu0
    %1309 = vmatprep.mubr.f32.mxu0 0.0
    %1310 = vmatmul.mubr.f32.gmra.mrb[0].mxu0 %v1232
    %v1311 = vpop.f32.mrb[0].mxu0
    %v1312 = vadd.f32 %v416, %v1311
    %v1313 = vpop.f32.mrb[0].mxu0
    %1314 = vmatprep.mubr.f32.mxu0 0.0
    %1315 = vmatmul.mubr.f32.gmra.mrb[0].mxu0 %v1235
    %v1316 = vpop.f32.mrb[0].mxu0
    %v1317 = vadd.f32 %v416, %v1316
    %v1318 = vpop.f32.mrb[0].mxu0
    %1319 = vmatprep.mubr.f32.mxu0 0.0
    %1320 = vmatmul.mubr.f32.gmra.mrb[0].mxu0 %v1238
    %v1321 = vpop.f32.mrb[0].mxu0
    %v1322 = vadd.f32 %v416, %v1321
    %v1323 = vpop.f32.mrb[0].mxu0
    %1324 = vdwg.mxu0
    %vm1325 = vcmp.lt.s32.totalorder %v761, 2
    %v1326 = vsel %vm1325, 9.0, 1.0
    %v1327 = vsub.f32 %v72, %v1307
    %v1328 = vsub.f32 %v73, %v1312
    %v1329 = vsub.f32 %v74, %v1317
    %v1330 = vsub.f32 %v75, %v1322
    %v1331 = vsub.f32 %v72, %v496
    %v1332 = vsub.f32 %v73, %v501
    %v1333 = vsub.f32 %v74, %v506
    %v1334 = vsub.f32 %v75, %v511
    %v1335 = vsub.f32 %v289, %v1118
    %v1336 = vsub.f32 %v294, %v1123
    %v1337 = vsub.f32 %v299, %v1126
    %v1338 = vsub.f32 %v304, %v1129
    %vm1339 = vcmp.lt.s32.totalorder %v758, 4
    %v1340 = vsel %vm1339, 1.0, 0.0
    %1342 = vset.pattern.permute.xlu0 0
    %1343 = vperm.xlu0 %1342, %v1340
    %v1344 = vpop.permute.xlu0 %1343
    %v1346 = vmul.f32 %v1327, %v1344
    %v1347 = vmul.f32 %v1328, %v1344
    %v1348 = vmul.f32 %v1329, %v1344
    %v1349 = vmul.f32 %v1330, %v1344
    %v1350 = vmul.f32 %v1331, %v1344
    %v1351 = vmul.f32 %v1332, %v1344
    %v1352 = vmul.f32 %v1333, %v1344
    %v1353 = vmul.f32 %v1334, %v1344
    %v1354 = vmul.f32 %v1335, %v1344
    %v1355 = vmul.f32 %v1336, %v1344
    %v1356 = vmul.f32 %v1337, %v1344
    %v1357 = vmul.f32 %v1338, %v1344
    %v1358 = vmul.f32 %v1346, %v1346
    %v1359 = vmul.f32 %v1347, %v1347
    %v1360 = vmul.f32 %v1348, %v1348
    %v1361 = vmul.f32 %v1349, %v1349
    %v1362 = vmul.f32 %v1358, %v1326
    %v1363 = vmul.f32 %v1359, %v1326
    %v1364 = vmul.f32 %v1360, %v1326
    %v1365 = vmul.f32 %v1361, %v1326
    %v1366 = vsel %vm82, %v1362, 0.0
    %v1367 = vsel %vm82, %v1363, 0.0
    %v1368 = vadd.f32 %v1366, %v1367
    %v1369 = vsel %vm82, %v1364, 0.0
    %v1370 = vadd.f32 %v1368, %v1369
    %v1371 = vsel %vm82, %v1365, 0.0
    %v1372 = vadd.f32 %v1370, %v1371
    %1373 = vadd.xlane.f32.xlu0 %v1372
    %v1374 = vpop.xlane.xlu0 %1373
    %v1375 = vrot.slane %v1374, 4
    %v1376 = vadd.f32 %v1374, %v1375
    %v1377 = vrot.slane %v1376, 2
    %v1378 = vadd.f32 %v1376, %v1377
    %v1379 = vrot.slane %v1378, 1
    %v1380 = vadd.f32 %v1378, %v1379
    %s1381 = vtos %v1380
    %v1382 = vmul.f32 %v1350, %v1350
    %v1383 = vmul.f32 %v1351, %v1351
    %v1384 = vmul.f32 %v1352, %v1352
    %v1385 = vmul.f32 %v1353, %v1353
    %v1386 = vmul.f32 %v1382, %v1326
    %v1387 = vmul.f32 %v1383, %v1326
    %v1388 = vmul.f32 %v1384, %v1326
    %v1389 = vmul.f32 %v1385, %v1326
    %v1390 = vsel %vm82, %v1386, 0.0
    %v1391 = vsel %vm82, %v1387, 0.0
    %v1392 = vadd.f32 %v1390, %v1391
    %v1393 = vsel %vm82, %v1388, 0.0
    %v1394 = vadd.f32 %v1392, %v1393
    %v1395 = vsel %vm82, %v1389, 0.0
    %v1396 = vadd.f32 %v1394, %v1395
    %1397 = vadd.xlane.f32.xlu0 %v1396
    %v1398 = vpop.xlane.xlu0 %1397
    %v1399 = vrot.slane %v1398, 4
    %v1400 = vadd.f32 %v1398, %v1399
    %v1401 = vrot.slane %v1400, 2
    %v1402 = vadd.f32 %v1400, %v1401
    %v1403 = vrot.slane %v1402, 1
    %v1404 = vadd.f32 %v1402, %v1403
    %s1405 = vtos %v1404
    %v1406 = vmul.f32 %v1354, %v1354
    %v1407 = vmul.f32 %v1355, %v1355
    %v1408 = vmul.f32 %v1356, %v1356
    %v1409 = vmul.f32 %v1357, %v1357
    %v1410 = vsel %vm311, %v1406, 0.0
    %v1411 = vsel %vm311, %v1407, 0.0
    %v1412 = vadd.f32 %v1410, %v1411
    %v1413 = vsel %vm311, %v1408, 0.0
    %v1414 = vadd.f32 %v1412, %v1413
    %v1415 = vsel %vm311, %v1409, 0.0
    %v1416 = vadd.f32 %v1414, %v1415
    %1417 = vadd.xlane.f32.xlu0 %v1416
    %v1418 = vpop.xlane.xlu0 %1417
    %v1419 = vrot.slane %v1418, 4
    %v1420 = vadd.f32 %v1418, %v1419
    %v1421 = vrot.slane %v1420, 2
    %v1422 = vadd.f32 %v1420, %v1421
    %v1423 = vrot.slane %v1422, 1
    %v1424 = vadd.f32 %v1422, %v1423
    %s1425 = vtos %v1424
    %v1426 = vand.u32 2147483647, %v1346
    %v1427 = vand.u32 2147483647, %v1347
    %v1428 = vand.u32 2147483647, %v1348
    %v1429 = vand.u32 2147483647, %v1349
    %v1430 = vand.u32 2147483647, %v1350
    %v1431 = vand.u32 2147483647, %v1351
    %v1432 = vand.u32 2147483647, %v1352
    %v1433 = vand.u32 2147483647, %v1353
    %v1434 = vsel %vm82, %v1426, -inf
    %1435 = vmax.xlane.f32.xlu0 %v1434
    %v1436 = vpop.xlane.xlu0 %1435
    %v1437 = vsel %vm82, %v1427, -inf
    %1438 = vmax.xlane.f32.xlu0 %v1437
    %v1439 = vpop.xlane.xlu0 %1438
    %v1440 = vsel %vm82, %v1428, -inf
    %1441 = vmax.xlane.f32.xlu0 %v1440
    %v1442 = vpop.xlane.xlu0 %1441
    %v1443 = vsel %vm82, %v1429, -inf
    %1444 = vmax.xlane.f32.xlu0 %v1443
    %v1445 = vpop.xlane.xlu0 %1444
    %v1446 = vrot.slane %v1436, 4
    %v1447 = vmax.f32 %v1436, %v1446
    %v1448 = vrot.slane %v1447, 2
    %v1449 = vmax.f32 %v1447, %v1448
    %v1450 = vrot.slane %v1449, 1
    %v1451 = vmax.f32 %v1449, %v1450
    %v1452 = vrot.slane %v1439, 4
    %v1453 = vmax.f32 %v1439, %v1452
    %v1454 = vrot.slane %v1453, 2
    %v1455 = vmax.f32 %v1453, %v1454
    %v1456 = vrot.slane %v1455, 1
    %v1457 = vmax.f32 %v1455, %v1456
    %v1458 = vrot.slane %v1442, 4
    %v1459 = vmax.f32 %v1442, %v1458
    %v1460 = vrot.slane %v1459, 2
    %v1461 = vmax.f32 %v1459, %v1460
    %v1462 = vrot.slane %v1461, 1
    %v1463 = vmax.f32 %v1461, %v1462
    %v1464 = vrot.slane %v1445, 4
    %v1465 = vmax.f32 %v1445, %v1464
    %v1466 = vrot.slane %v1465, 2
    %v1467 = vmax.f32 %v1465, %v1466
    %v1468 = vrot.slane %v1467, 1
    %v1469 = vmax.f32 %v1467, %v1468
    %v1470 = vsel %vm82, %v1430, -inf
    %1471 = vmax.xlane.f32.xlu0 %v1470
    %v1472 = vpop.xlane.xlu0 %1471
    %v1473 = vsel %vm82, %v1431, -inf
    %1474 = vmax.xlane.f32.xlu0 %v1473
    %v1475 = vpop.xlane.xlu0 %1474
    %v1476 = vsel %vm82, %v1432, -inf
    %1477 = vmax.xlane.f32.xlu0 %v1476
    %v1478 = vpop.xlane.xlu0 %1477
    %v1479 = vsel %vm82, %v1433, -inf
    %1480 = vmax.xlane.f32.xlu0 %v1479
    %v1481 = vpop.xlane.xlu0 %1480
    %v1482 = vrot.slane %v1472, 4
    %v1483 = vmax.f32 %v1472, %v1482
    %v1484 = vrot.slane %v1483, 2
    %v1485 = vmax.f32 %v1483, %v1484
    %v1486 = vrot.slane %v1485, 1
    %v1487 = vmax.f32 %v1485, %v1486
    %v1488 = vrot.slane %v1475, 4
    %v1489 = vmax.f32 %v1475, %v1488
    %v1490 = vrot.slane %v1489, 2
    %v1491 = vmax.f32 %v1489, %v1490
    %v1492 = vrot.slane %v1491, 1
    %v1493 = vmax.f32 %v1491, %v1492
    %v1494 = vrot.slane %v1478, 4
    %v1495 = vmax.f32 %v1478, %v1494
    %v1496 = vrot.slane %v1495, 2
    %v1497 = vmax.f32 %v1495, %v1496
    %v1498 = vrot.slane %v1497, 1
    %v1499 = vmax.f32 %v1497, %v1498
    %v1500 = vrot.slane %v1481, 4
    %v1501 = vmax.f32 %v1481, %v1500
    %v1502 = vrot.slane %v1501, 2
    %v1503 = vmax.f32 %v1501, %v1502
    %v1504 = vrot.slane %v1503, 1
    %v1505 = vmax.f32 %v1503, %v1504
    %vm1506 = vcmask 0
    %v1507 = vsel %vm1506, %v1451, 0.0
    %v1508 = vsel %vm1506, %v1457, 0.0
    %v1509 = vadd.f32 %v1507, %v1508
    %v1510 = vsel %vm1506, %v1463, 0.0
    %v1511 = vadd.f32 %v1509, %v1510
    %v1512 = vsel %vm1506, %v1469, 0.0
    %v1513 = vadd.f32 %v1511, %v1512
    %1514 = vadd.xlane.f32.xlu0 %v1513
    %v1515 = vpop.xlane.xlu0 %1514
    %v1516 = vrot.slane %v1515, 4
    %v1517 = vadd.f32 %v1515, %v1516
    %v1518 = vrot.slane %v1517, 2
    %v1519 = vadd.f32 %v1517, %v1518
    %v1520 = vrot.slane %v1519, 1
    %v1521 = vadd.f32 %v1519, %v1520
    %s1522 = vtos %v1521
    %v1523 = vsel %vm1506, %v1487, 0.0
    %v1524 = vsel %vm1506, %v1493, 0.0
    %v1525 = vadd.f32 %v1523, %v1524
    %v1526 = vsel %vm1506, %v1499, 0.0
    %v1527 = vadd.f32 %v1525, %v1526
    %v1528 = vsel %vm1506, %v1505, 0.0
    %v1529 = vadd.f32 %v1527, %v1528
    %1530 = vadd.xlane.f32.xlu0 %v1529
    %v1531 = vpop.xlane.xlu0 %1530
    %v1532 = vrot.slane %v1531, 4
    %v1533 = vadd.f32 %v1531, %v1532
    %v1534 = vrot.slane %v1533, 2
    %v1535 = vadd.f32 %v1533, %v1534
    %v1536 = vrot.slane %v1535, 1
    %v1537 = vadd.f32 %v1535, %v1536
    %s1538 = vtos %v1537
    %s1539 = sadd.f32 %s1522, %s1538
    %v1540 = vrcp.pop 16.0
    %s1541 = vtos %v1540
    %s1542 = smul.f32 %s1381, %s1541
    %v1543 = vrcp.pop 16.0
    %s1544 = vtos %v1543
    %s1545 = smul.f32 %s1425, %s1544
    %v1546 = vrcp.pop 16.0
    %s1547 = vtos %v1546
    %s1548 = smul.f32 %s1405, %s1547
    %v1549 = vrcp.pop 16.0
    %s1550 = vtos %v1549
    %s1551 = smul.f32 %s1539, %s1550
    %v1552 = vmul.f32 %v38, %v38
    %v1553 = vmul.f32 %v39, %v39
    %v1554 = vmul.f32 %v40, %v40
    %v1555 = vmul.f32 %v41, %v41
    %v1556 = vmul.f32 %v42, %v42
    %v1557 = vmul.f32 %v43, %v43
    %v1558 = vmul.f32 %v44, %v44
    %v1559 = vsel %vm201, %v1552, 0.0
    %v1560 = vsel %vm201, %v1553, 0.0
    %v1561 = vadd.f32 %v1559, %v1560
    %v1562 = vsel %vm201, %v1554, 0.0
    %v1563 = vadd.f32 %v1561, %v1562
    %v1564 = vsel %vm201, %v1555, 0.0
    %v1565 = vadd.f32 %v1563, %v1564
    %v1566 = vsel %vm201, %v1556, 0.0
    %v1567 = vadd.f32 %v1565, %v1566
    %v1568 = vsel %vm201, %v1557, 0.0
    %v1569 = vadd.f32 %v1567, %v1568
    %v1570 = vsel %vm201, %v1558, 0.0
    %v1571 = vadd.f32 %v1569, %v1570
    %1572 = vadd.xlane.f32.xlu0 %v1571
    %v1573 = vpop.xlane.xlu0 %1572
    %v1574 = vrot.slane %v1573, 4
    %v1575 = vadd.f32 %v1573, %v1574
    %v1576 = vrot.slane %v1575, 2
    %v1577 = vadd.f32 %v1575, %v1576
    %v1578 = vrot.slane %v1577, 1
    %v1579 = vadd.f32 %v1577, %v1578
    %s1580 = vtos %v1579
    %v1581 = vmul.f32 %v45, %v45
    %v1582 = vmul.f32 %v46, %v46
    %v1583 = vmul.f32 %v47, %v47
    %v1584 = vmul.f32 %v48, %v48
    %v1585 = vmul.f32 %v49, %v49
    %v1586 = vmul.f32 %v50, %v50
    %v1587 = vmul.f32 %v51, %v51
    %v1588 = vmul.f32 %v52, %v52
    %v1589 = vsel %vm201, %v1581, 0.0
    %v1590 = vsel %vm201, %v1582, 0.0
    %v1591 = vadd.f32 %v1589, %v1590
    %v1592 = vsel %vm201, %v1583, 0.0
    %v1593 = vadd.f32 %v1591, %v1592
    %v1594 = vsel %vm201, %v1584, 0.0
    %v1595 = vadd.f32 %v1593, %v1594
    %v1596 = vsel %vm201, %v1585, 0.0
    %v1597 = vadd.f32 %v1595, %v1596
    %v1598 = vsel %vm201, %v1586, 0.0
    %v1599 = vadd.f32 %v1597, %v1598
    %v1600 = vsel %vm201, %v1587, 0.0
    %v1601 = vadd.f32 %v1599, %v1600
    %v1602 = vsel %vm201, %v1588, 0.0
    %v1603 = vadd.f32 %v1601, %v1602
    %1604 = vadd.xlane.f32.xlu0 %v1603
    %v1605 = vpop.xlane.xlu0 %1604
    %v1606 = vrot.slane %v1605, 4
    %v1607 = vadd.f32 %v1605, %v1606
    %v1608 = vrot.slane %v1607, 2
    %v1609 = vadd.f32 %v1607, %v1608
    %v1610 = vrot.slane %v1609, 1
    %v1611 = vadd.f32 %v1609, %v1610
    %s1612 = vtos %v1611
    %s1613 = smul.f32 %s31, %s1548
    %s1614 = smul.f32 %s32, %s1542
    %s1615 = sadd.f32 %s1613, %s1614
    %s1616 = smul.f32 %s33, 9.0
    %s1617 = smul.f32 %s1616, %s1545
    %s1618 = sadd.f32 %s1615, %s1617
    %s1619 = smul.f32 %s34, 9.0
    %s1620 = smul.f32 %s1619, %s1551
    %s1621 = sadd.f32 %s1618, %s1620
    %s1622 = smul.f32 %s35, %s1580
    %s1623 = sadd.f32 %s1621, %s1622
    %s1624 = smul.f32 %s36, %s1612
    %s1625 = sadd.f32 %s1623, %s1624
    %s1626 = smul.f32 %s37, 0.0
    %s1627 = sadd.f32 %s1625, %s1626
    %s1628 = scalar_lea.smem [#allocation5], 0
    %1629 = sst [smem:[%s1628]] %s1627
    // Predicated region
    $region22: #{tpu_custom_call.1} parent=1 // pred_check
      _
    $region23: #{tpu_custom_call.1} parent=1 // pred_check_branch
      %1631 = sbr.rel (0) target = $region25
    $region24: #{tpu_custom_call.1} parent=1 // pred_region
      %s1633 = ssub.s32 16, 16
      %1634 = vsyncadd [#allocation3], %s1633
      %1637 = dma.smem_to_hbm [#allocation5], 16, %s4, [#allocation3]
    $region25: #{tpu_custom_call.1} parent=1 // pred_fallthru
      _
    // Predicated region
    $region26: #{tpu_custom_call.1} parent=1 // pred_check
      _
    $region27: #{tpu_custom_call.1} parent=1 // pred_check_branch
      %1639 = sbr.rel (0) target = $region29
    $region28: #{tpu_custom_call.1} parent=1 // pred_region
      %1640 = dma.done [#allocation3], 16
    $region29: #{tpu_custom_call.1} parent=1 // pred_fallthru
      _
    %1641 = sfence
    %1642 = vsyncpa [#allocation3], 1
    %1643 = vsyncpa [#allocation4], 1

</llo_original>
